<compile_context>
chip_gen: v6e
topology: v6e:2x2x1
jax: 0.10.0
libtpu: 0.0.40
codegen_flags: <defaults>
</compile_context>

<pallas_src>
import functools

import jax
import jax.numpy as jnp
from jax import lax
from jax.experimental import pallas as pl
from jax.experimental.pallas import tpu as pltpu


def _attention_kernel(x_ref,    # (1, Cin, HW)
                      w1_ref,   # (Ci, Cin)    conv1 1x1 weights (transposed)
                      b1_ref,   # (Ci, 1)
                      w2_ref,   # (Ci, 9*Ci)   dilated conv2 weights, tap-major columns
                      b2_ref,   # (Ci, 1)
                      w3_ref,   # (1, 9*Ci)    dilated conv3 folded with 1x1 conv4
                      b3_ref,   # (1, 1)
                      out_ref,  # (1, Cin, HW)
                      sp_ref,   # (1, 1, HW)
                      *, height, width, dilation):
    x = x_ref[0]                                   # (Cin, HW) f32, HW on lanes
    Cin, HW = x.shape
    Ci = b1_ref.shape[0]
    d = dilation
    H, W = height, width

    # ---- in-kernel boundary masks (no HBM mask traffic) -------------------
    # Flattened index col = h*W + w.  Row conditions reduce to compares on col
    # directly; column conditions use w = col & (W-1) (W is asserted to be a
    # power of two in the wrapper).
    col = lax.broadcasted_iota(jnp.int32, (Ci, HW), 1)
    w_pos = jnp.bitwise_and(col, W - 1)
    m_top = col >= d * W                 # tap reads row h - d is valid (ky == 0)
    m_bot = col < (H - d) * W            # tap reads row h + d is valid (ky == 2)
    m_left = w_pos >= d                  # tap reads col w - d is valid (kx == 0)
    m_right = w_pos < W - d              # tap reads col w + d is valid (kx == 2)

    shifts, masks = [], []
    for ky in range(3):
        for kx in range(3):
            off = (ky - 1) * d * W + (kx - 1) * d
            shifts.append((-off) % HW)
            conds = []
            if ky == 0:
                conds.append(m_top)
            if ky == 2:
                conds.append(m_bot)
            if kx == 0:
                conds.append(m_left)
            if kx == 2:
                conds.append(m_right)
            m = None
            for c in conds:
                m = c if m is None else jnp.logical_and(m, c)
            masks.append(m)                        # None for the center tap

    def tap(h, t):
        # Per-tap lane roll + zero-padding mask (cyclic roll over flattened HW
        # is correct only because invalid positions are masked).
        r = h if shifts[t] == 0 else pltpu.roll(h, shifts[t], 1)
        return r if masks[t] is None else jnp.where(masks[t], r, 0.0)

    dot = functools.partial(jnp.dot, preferred_element_type=jnp.float32,
                            precision=jax.lax.Precision.HIGHEST)

    # ---------------- channel branch ---------------------------------------
    # gate = sigmoid(sigmoid(avg_pool)); the shared_MLP / max-pool of the
    # reference are dead code (overwritten before use) and are skipped.
    avg = jnp.mean(x, axis=1, keepdims=True)       # (Cin, 1)
    channel = jax.nn.sigmoid(jax.nn.sigmoid(avg))  # (Cin, 1)

    # ---------------- spatial branch (channel contractions on the MXU) -----
    # conv1: 1x1, Cin -> Ci
    h1 = dot(w1_ref[...], x) + b1_ref[...]                             # (Ci, HW)

    # conv2: dilated 3x3, Ci -> Ci — stack 9 taps and do one dot.
    taps1 = jnp.concatenate([tap(h1, t) for t in range(9)], axis=0)    # (9*Ci, HW)
    h2 = dot(w2_ref[...], taps1) + b2_ref[...]                         # (Ci, HW)

    # conv3 (dilated 3x3, Ci -> Ci) folded with conv4 (1x1, Ci -> 1).
    taps2 = jnp.concatenate([tap(h2, t) for t in range(9)], axis=0)    # (9*Ci, HW)
    s = dot(w3_ref[...], taps2) + b3_ref[...]                          # (1, HW)

    spatial = jax.nn.sigmoid(s)                    # (1, HW) — lane-dense store
    sp_ref[0] = spatial

    # ---------------- fused epilogue: out = x * (1 + channel + spatial) ----
    out_ref[0] = x * ((1.0 + channel) + spatial)


def attention_block_forward(x_nchw, p, dilation):
    B, C, H, W = x_nchw.shape
    ci = p["sw1"].shape[3]
    HW = H * W
    # dilated 3x3 convs (padding=4) must be size preserving for the module's
    # broadcast in forward() to be valid:
    assert 8 - 2 * dilation == 0, "module requires dilation_rate == 4"
    # TODO(synk): for non-power-of-two W pass a tiny (1, HW) int32 w-index
    # operand instead of the in-kernel `col & (W-1)` (vector integer mod has no
    # TPU lowering); not needed for this configuration.
    assert (W & (W - 1)) == 0, "kernel currently requires W to be a power of two"

    x = x_nchw.reshape(B, C, HW).astype(jnp.float32)    # lane-dense: HW on lanes

    # conv1 (1x1): (Ci, Cin) for the MXU dot.
    w1 = p["sw1"].reshape(C, ci).T                      # (ci, C)
    b1 = p["sb1"].reshape(ci, 1)
    # conv2 (dilated 3x3): columns ordered (tap-major, in-channel minor).
    w2 = p["sw2"].reshape(9 * ci, ci).T                 # (ci, 9*ci)
    b2 = p["sb2"].reshape(ci, 1)
    # conv3 (dilated 3x3) folded with conv4 (1x1, ci -> 1): exact algebraic fold.
    w4 = p["sw4"].reshape(ci)
    w3 = jnp.sum(p["sw3"] * w4[None, None, None, :], axis=-1)   # (3, 3, ci)
    w3 = w3.reshape(1, 9 * ci)                          # (1, 9*ci)
    b3 = (jnp.sum(p["sb3"] * w4) + p["sb4"][0]).reshape(1, 1)

    kernel = functools.partial(_attention_kernel, height=H, width=W,
                               dilation=dilation)

    # TODO(synk): for production-sized H, W add a halo-tiled spatial grid axis
    # in (C, H, W) layout (W on lanes, H on sublanes; halo = 2*dilation rows per
    # chained conv) so the pipeline gets multiple overlapped steps and per-step
    # VMEM is sized per generation (v7x: 64 MiB physical / 32 MiB scoped).
    out, sp = pl.pallas_call(
        kernel,
        out_shape=(jax.ShapeDtypeStruct((B, C, HW), jnp.float32),
                   jax.ShapeDtypeStruct((B, 1, HW), jnp.float32)),
        grid_spec=pltpu.PrefetchScalarGridSpec(
            num_scalar_prefetch=0,
            grid=(B,),
            in_specs=[
                pl.BlockSpec((1, C, HW), lambda b: (b, 0, 0)),
                pl.BlockSpec((ci, C), lambda b: (0, 0)),
                pl.BlockSpec((ci, 1), lambda b: (0, 0)),
                pl.BlockSpec((ci, 9 * ci), lambda b: (0, 0)),
                pl.BlockSpec((ci, 1), lambda b: (0, 0)),
                pl.BlockSpec((1, 9 * ci), lambda b: (0, 0)),
                pl.BlockSpec((1, 1), lambda b: (0, 0)),
            ],
            out_specs=[
                pl.BlockSpec((1, C, HW), lambda b: (b, 0, 0)),
                pl.BlockSpec((1, 1, HW), lambda b: (b, 0, 0)),
            ],
        ),
        compiler_params=pltpu.CompilerParams(
            dimension_semantics=("parallel",),      # B>=2 keeps both v7x TCs busy
            vmem_limit_bytes=32 * 1024 * 1024),
    )(x, w1, b1, w2, b2, w3, b3)

    # NCHW outputs (pure reshape, no transpose needed)
    return out.reshape(B, C, H, W), sp.reshape(B, 1, H, W)


def make_params(in_channel, gamma, key):
    """Deterministic synthetic parameters (conv weights stored HWIO, linears as (in,out))."""
    ci = in_channel // gamma
    ks = jax.random.split(key, 12)

    def w(k, shape, fan_in):
        bound = 1.0 / (fan_in ** 0.5)
        return jax.random.uniform(k, shape, jnp.float32, -bound, bound)

    return dict(
        sw1=w(ks[0], (1, 1, in_channel, ci), in_channel),
        sb1=w(ks[1], (ci,), in_channel),
        sw2=w(ks[2], (3, 3, ci, ci), 9 * ci),
        sb2=w(ks[3], (ci,), 9 * ci),
        sw3=w(ks[4], (3, 3, ci, ci), 9 * ci),
        sb3=w(ks[5], (ci,), 9 * ci),
        sw4=w(ks[6], (1, 1, ci, 1), ci),
        sb4=w(ks[7], (1,), ci),
        # shared_MLP params exist in the module but are dead in forward()
        # (result overwritten before use) -> kept here for parity, unused.
        mw1=w(ks[8], (in_channel, ci), in_channel),
        mb1=w(ks[9], (ci,), in_channel),
        mw2=w(ks[10], (ci, in_channel), ci),
        mb2=w(ks[11], (in_channel,), ci),
    )


def reference_forward(x_nchw, p, dilation):
    """Pure-JAX reference mirroring the PyTorch forward (for correctness check)."""
    x = x_nchw.astype(jnp.float32)

    def conv(v, w_hwio, b, dil, padn):
        w = jnp.transpose(w_hwio, (3, 2, 0, 1))          # OIHW
        out = lax.conv_general_dilated(
            v, w, window_strides=(1, 1),
            padding=[(padn, padn), (padn, padn)],
            rhs_dilation=(dil, dil),
            dimension_numbers=("NCHW", "OIHW", "NCHW"),
            precision=lax.Precision.HIGHEST)
        return out + b.reshape(1, -1, 1, 1)

    avg = jnp.mean(x, axis=(2, 3), keepdims=True)
    channel = jax.nn.sigmoid(jax.nn.sigmoid(avg))        # [B, C, 1, 1]

    s = conv(x, p["sw1"], p["sb1"], 1, 0)
    s = conv(s, p["sw2"], p["sb2"], dilation, 4)
    s = conv(s, p["sw3"], p["sb3"], dilation, 4)
    s = conv(s, p["sw4"], p["sb4"], 1, 0)
    spatial = jax.nn.sigmoid(s)                          # [B, 1, H, W]

    m_f = channel + spatial
    return x + x * m_f, spatial


if __name__ == "__main__":
    in_channel, gamma, dilation = 8, 2, 4
    B, H, W = 2, 16, 16

    key = jax.random.PRNGKey(0)
    kp, kx = jax.random.split(key)
    params = make_params(in_channel, gamma, kp)
    x = jax.random.normal(kx, (B, in_channel, H, W), jnp.float32)

    out, spatial_out = attention_block_forward(x, params, dilation)
    out = jax.block_until_ready(out)
    spatial_out = jax.block_until_ready(spatial_out)

    ref_out, ref_sp = reference_forward(x, params, dilation)

    assert out.shape == (B, in_channel, H, W)
    assert spatial_out.shape == (B, 1, H, W)
    assert bool(jnp.allclose(out, ref_out, atol=1e-3, rtol=1e-3))
    assert bool(jnp.allclose(spatial_out, ref_sp, atol=1e-3, rtol=1e-3))

    print("KERNEL_OK")
</pallas_src>

<mosaic_0001>
module attributes {stable_mosaic.version = 11 : i64} {
  func.func @_attention_kernel(%arg0: i32, %arg1: memref<1x8x256xf32, #tpu.memory_space<vmem>>, %arg2: memref<4x8xf32, #tpu.memory_space<vmem>>, %arg3: memref<4x1xf32, #tpu.memory_space<vmem>>, %arg4: memref<4x36xf32, #tpu.memory_space<vmem>>, %arg5: memref<4x1xf32, #tpu.memory_space<vmem>>, %arg6: memref<1x36xf32, #tpu.memory_space<vmem>>, %arg7: memref<1x1xf32, #tpu.memory_space<vmem>>, %arg8: memref<1x8x256xf32, #tpu.memory_space<vmem>>, %arg9: memref<1x1x256xf32, #tpu.memory_space<vmem>>) attributes {dimension_semantics = [#tpu.dimension_semantics<parallel>], iteration_bounds = array<i64: 2>, scalar_prefetch = 0 : i64, scratch_operands = 0 : i64, tpu.core_type = #tpu.core_type<tc>, window_params = [{transform_indices = @transform_0, window_bounds = array<i64: 1, 8, 256>}, {pipeline_mode = #tpu.pipeline_mode<synchronous>, transform_indices = @transform_1, window_bounds = array<i64: 4, 8>}, {pipeline_mode = #tpu.pipeline_mode<synchronous>, transform_indices = @transform_2, window_bounds = array<i64: 4, 1>}, {pipeline_mode = #tpu.pipeline_mode<synchronous>, transform_indices = @transform_3, window_bounds = array<i64: 4, 36>}, {pipeline_mode = #tpu.pipeline_mode<synchronous>, transform_indices = @transform_4, window_bounds = array<i64: 4, 1>}, {pipeline_mode = #tpu.pipeline_mode<synchronous>, transform_indices = @transform_5, window_bounds = array<i64: 1, 36>}, {pipeline_mode = #tpu.pipeline_mode<synchronous>, transform_indices = @transform_6, window_bounds = array<i64: 1, 1>}, {transform_indices = @transform_7, window_bounds = array<i64: 1, 8, 256>}, {transform_indices = @transform_8, window_bounds = array<i64: 1, 1, 256>}]} {
    %c0 = arith.constant 0 : index
    %c0_0 = arith.constant 0 : index
    %c0_1 = arith.constant 0 : index
    %0 = vector.load %arg1[%c0, %c0_0, %c0_1] : memref<1x8x256xf32, #tpu.memory_space<vmem>>, vector<1x8x256xf32>
    %1 = vector.shape_cast %0 : vector<1x8x256xf32> to vector<8x256xf32>
    %2 = tpu.iota {dimensions = array<i32: 1>} : vector<4x256xi32>
    %c15_i32 = arith.constant 15 : i32
    %3 = vector.broadcast %c15_i32 : i32 to vector<4x256xi32>
    %4 = arith.andi %2, %3 : vector<4x256xi32>
    %c64_i32 = arith.constant 64 : i32
    %5 = vector.broadcast %c64_i32 : i32 to vector<4x256xi32>
    %6 = arith.cmpi sge, %2, %5 : vector<4x256xi32>
    %c192_i32 = arith.constant 192 : i32
    %7 = vector.broadcast %c192_i32 : i32 to vector<4x256xi32>
    %8 = arith.cmpi slt, %2, %7 : vector<4x256xi32>
    %c4_i32 = arith.constant 4 : i32
    %9 = vector.broadcast %c4_i32 : i32 to vector<4x256xi32>
    %10 = arith.cmpi sge, %4, %9 : vector<4x256xi32>
    %c12_i32 = arith.constant 12 : i32
    %11 = vector.broadcast %c12_i32 : i32 to vector<4x256xi32>
    %12 = arith.cmpi slt, %4, %11 : vector<4x256xi32>
    %13 = arith.andi %6, %10 : vector<4x256xi1>
    %14 = arith.andi %6, %12 : vector<4x256xi1>
    %15 = arith.andi %8, %10 : vector<4x256xi1>
    %16 = arith.andi %8, %12 : vector<4x256xi1>
    %cst = arith.constant dense<0.000000e+00> : vector<8xf32>
    %17 = vector.multi_reduction <add>, %1, %cst [1] : vector<8x256xf32> to vector<8xf32>
    %18 = vector.shape_cast %17 : vector<8xf32> to vector<8x1xf32>
    %cst_2 = arith.constant 2.560000e+02 : f32
    %19 = vector.broadcast %cst_2 : f32 to vector<8x1xf32>
    %20 = arith.divf %18, %19 : vector<8x1xf32>
    %21 = arith.negf %20 : vector<8x1xf32>
    %22 = math.exp %21 : vector<8x1xf32>
    %cst_3 = arith.constant 1.000000e+00 : f32
    %23 = vector.broadcast %cst_3 : f32 to vector<8x1xf32>
    %24 = arith.addf %23, %22 : vector<8x1xf32>
    %25 = arith.divf %23, %24 : vector<8x1xf32>
    %26 = arith.negf %25 : vector<8x1xf32>
    %27 = math.exp %26 : vector<8x1xf32>
    %cst_4 = arith.constant 1.000000e+00 : f32
    %28 = vector.broadcast %cst_4 : f32 to vector<8x1xf32>
    %29 = arith.addf %28, %27 : vector<8x1xf32>
    %30 = arith.divf %28, %29 : vector<8x1xf32>
    %c0_5 = arith.constant 0 : index
    %c0_6 = arith.constant 0 : index
    %31 = vector.load %arg2[%c0_5, %c0_6] : memref<4x8xf32, #tpu.memory_space<vmem>>, vector<4x8xf32>
    %cst_7 = arith.constant dense<0.000000e+00> : vector<4x256xf32>
    %32 = tpu.matmul %31, %1, %cst_7 {dimension_numbers = #tpu.dot_dimension_numbers<[1], [0], [0], [1], [0, 0, 1, 1], [], []>, precision = #tpu.contract_precision<fp32>} : vector<4x8xf32>, vector<8x256xf32>, vector<4x256xf32> -> vector<4x256xf32>
    %c0_8 = arith.constant 0 : index
    %c0_9 = arith.constant 0 : index
    %33 = vector.load %arg3[%c0_8, %c0_9] : memref<4x1xf32, #tpu.memory_space<vmem>>, vector<4x1xf32>
    %34 = vector.broadcast %33 : vector<4x1xf32> to vector<4x256xf32>
    %35 = arith.addf %32, %34 : vector<4x256xf32>
    %c68_i32 = arith.constant 68 : i32
    %36 = tpu.dynamic_rotate %35 by %c68_i32 dim 1 : vector<4x256xf32>, i32 -> vector<4x256xf32>
    %cst_10 = arith.constant 0.000000e+00 : f32
    %37 = vector.broadcast %cst_10 : f32 to vector<4x256xf32>
    %38 = arith.select %13, %36, %37 : vector<4x256xi1>, vector<4x256xf32>
    %c64_i32_11 = arith.constant 64 : i32
    %39 = tpu.dynamic_rotate %35 by %c64_i32_11 dim 1 : vector<4x256xf32>, i32 -> vector<4x256xf32>
    %cst_12 = arith.constant 0.000000e+00 : f32
    %40 = vector.broadcast %cst_12 : f32 to vector<4x256xf32>
    %41 = arith.select %6, %39, %40 : vector<4x256xi1>, vector<4x256xf32>
    %c60_i32 = arith.constant 60 : i32
    %42 = tpu.dynamic_rotate %35 by %c60_i32 dim 1 : vector<4x256xf32>, i32 -> vector<4x256xf32>
    %cst_13 = arith.constant 0.000000e+00 : f32
    %43 = vector.broadcast %cst_13 : f32 to vector<4x256xf32>
    %44 = arith.select %14, %42, %43 : vector<4x256xi1>, vector<4x256xf32>
    %c4_i32_14 = arith.constant 4 : i32
    %45 = tpu.dynamic_rotate %35 by %c4_i32_14 dim 1 : vector<4x256xf32>, i32 -> vector<4x256xf32>
    %cst_15 = arith.constant 0.000000e+00 : f32
    %46 = vector.broadcast %cst_15 : f32 to vector<4x256xf32>
    %47 = arith.select %10, %45, %46 : vector<4x256xi1>, vector<4x256xf32>
    %c252_i32 = arith.constant 252 : i32
    %48 = tpu.dynamic_rotate %35 by %c252_i32 dim 1 : vector<4x256xf32>, i32 -> vector<4x256xf32>
    %cst_16 = arith.constant 0.000000e+00 : f32
    %49 = vector.broadcast %cst_16 : f32 to vector<4x256xf32>
    %50 = arith.select %12, %48, %49 : vector<4x256xi1>, vector<4x256xf32>
    %c196_i32 = arith.constant 196 : i32
    %51 = tpu.dynamic_rotate %35 by %c196_i32 dim 1 : vector<4x256xf32>, i32 -> vector<4x256xf32>
    %cst_17 = arith.constant 0.000000e+00 : f32
    %52 = vector.broadcast %cst_17 : f32 to vector<4x256xf32>
    %53 = arith.select %15, %51, %52 : vector<4x256xi1>, vector<4x256xf32>
    %c192_i32_18 = arith.constant 192 : i32
    %54 = tpu.dynamic_rotate %35 by %c192_i32_18 dim 1 : vector<4x256xf32>, i32 -> vector<4x256xf32>
    %cst_19 = arith.constant 0.000000e+00 : f32
    %55 = vector.broadcast %cst_19 : f32 to vector<4x256xf32>
    %56 = arith.select %8, %54, %55 : vector<4x256xi1>, vector<4x256xf32>
    %c188_i32 = arith.constant 188 : i32
    %57 = tpu.dynamic_rotate %35 by %c188_i32 dim 1 : vector<4x256xf32>, i32 -> vector<4x256xf32>
    %cst_20 = arith.constant 0.000000e+00 : f32
    %58 = vector.broadcast %cst_20 : f32 to vector<4x256xf32>
    %59 = arith.select %16, %57, %58 : vector<4x256xi1>, vector<4x256xf32>
    %60 = tpu.concatenate %38, %41, %44, %47, %35, %50, %53, %56, %59 in 0 : vector<4x256xf32>, vector<4x256xf32>, vector<4x256xf32>, vector<4x256xf32>, vector<4x256xf32>, vector<4x256xf32>, vector<4x256xf32>, vector<4x256xf32>, vector<4x256xf32> -> vector<36x256xf32>
    %c0_21 = arith.constant 0 : index
    %c0_22 = arith.constant 0 : index
    %61 = vector.load %arg4[%c0_21, %c0_22] : memref<4x36xf32, #tpu.memory_space<vmem>>, vector<4x36xf32>
    %cst_23 = arith.constant dense<0.000000e+00> : vector<4x256xf32>
    %62 = tpu.matmul %61, %60, %cst_23 {dimension_numbers = #tpu.dot_dimension_numbers<[1], [0], [0], [1], [0, 0, 1, 1], [], []>, precision = #tpu.contract_precision<fp32>} : vector<4x36xf32>, vector<36x256xf32>, vector<4x256xf32> -> vector<4x256xf32>
    %c0_24 = arith.constant 0 : index
    %c0_25 = arith.constant 0 : index
    %63 = vector.load %arg5[%c0_24, %c0_25] : memref<4x1xf32, #tpu.memory_space<vmem>>, vector<4x1xf32>
    %64 = vector.broadcast %63 : vector<4x1xf32> to vector<4x256xf32>
    %65 = arith.addf %62, %64 : vector<4x256xf32>
    %c68_i32_26 = arith.constant 68 : i32
    %66 = tpu.dynamic_rotate %65 by %c68_i32_26 dim 1 : vector<4x256xf32>, i32 -> vector<4x256xf32>
    %cst_27 = arith.constant 0.000000e+00 : f32
    %67 = vector.broadcast %cst_27 : f32 to vector<4x256xf32>
    %68 = arith.select %13, %66, %67 : vector<4x256xi1>, vector<4x256xf32>
    %c64_i32_28 = arith.constant 64 : i32
    %69 = tpu.dynamic_rotate %65 by %c64_i32_28 dim 1 : vector<4x256xf32>, i32 -> vector<4x256xf32>
    %cst_29 = arith.constant 0.000000e+00 : f32
    %70 = vector.broadcast %cst_29 : f32 to vector<4x256xf32>
    %71 = arith.select %6, %69, %70 : vector<4x256xi1>, vector<4x256xf32>
    %c60_i32_30 = arith.constant 60 : i32
    %72 = tpu.dynamic_rotate %65 by %c60_i32_30 dim 1 : vector<4x256xf32>, i32 -> vector<4x256xf32>
    %cst_31 = arith.constant 0.000000e+00 : f32
    %73 = vector.broadcast %cst_31 : f32 to vector<4x256xf32>
    %74 = arith.select %14, %72, %73 : vector<4x256xi1>, vector<4x256xf32>
    %c4_i32_32 = arith.constant 4 : i32
    %75 = tpu.dynamic_rotate %65 by %c4_i32_32 dim 1 : vector<4x256xf32>, i32 -> vector<4x256xf32>
    %cst_33 = arith.constant 0.000000e+00 : f32
    %76 = vector.broadcast %cst_33 : f32 to vector<4x256xf32>
    %77 = arith.select %10, %75, %76 : vector<4x256xi1>, vector<4x256xf32>
    %c252_i32_34 = arith.constant 252 : i32
    %78 = tpu.dynamic_rotate %65 by %c252_i32_34 dim 1 : vector<4x256xf32>, i32 -> vector<4x256xf32>
    %cst_35 = arith.constant 0.000000e+00 : f32
    %79 = vector.broadcast %cst_35 : f32 to vector<4x256xf32>
    %80 = arith.select %12, %78, %79 : vector<4x256xi1>, vector<4x256xf32>
    %c196_i32_36 = arith.constant 196 : i32
    %81 = tpu.dynamic_rotate %65 by %c196_i32_36 dim 1 : vector<4x256xf32>, i32 -> vector<4x256xf32>
    %cst_37 = arith.constant 0.000000e+00 : f32
    %82 = vector.broadcast %cst_37 : f32 to vector<4x256xf32>
    %83 = arith.select %15, %81, %82 : vector<4x256xi1>, vector<4x256xf32>
    %c192_i32_38 = arith.constant 192 : i32
    %84 = tpu.dynamic_rotate %65 by %c192_i32_38 dim 1 : vector<4x256xf32>, i32 -> vector<4x256xf32>
    %cst_39 = arith.constant 0.000000e+00 : f32
    %85 = vector.broadcast %cst_39 : f32 to vector<4x256xf32>
    %86 = arith.select %8, %84, %85 : vector<4x256xi1>, vector<4x256xf32>
    %c188_i32_40 = arith.constant 188 : i32
    %87 = tpu.dynamic_rotate %65 by %c188_i32_40 dim 1 : vector<4x256xf32>, i32 -> vector<4x256xf32>
    %cst_41 = arith.constant 0.000000e+00 : f32
    %88 = vector.broadcast %cst_41 : f32 to vector<4x256xf32>
    %89 = arith.select %16, %87, %88 : vector<4x256xi1>, vector<4x256xf32>
    %90 = tpu.concatenate %68, %71, %74, %77, %65, %80, %83, %86, %89 in 0 : vector<4x256xf32>, vector<4x256xf32>, vector<4x256xf32>, vector<4x256xf32>, vector<4x256xf32>, vector<4x256xf32>, vector<4x256xf32>, vector<4x256xf32>, vector<4x256xf32> -> vector<36x256xf32>
    %c0_42 = arith.constant 0 : index
    %c0_43 = arith.constant 0 : index
    %91 = vector.load %arg6[%c0_42, %c0_43] : memref<1x36xf32, #tpu.memory_space<vmem>>, vector<1x36xf32>
    %cst_44 = arith.constant dense<0.000000e+00> : vector<1x256xf32>
    %92 = tpu.matmul %91, %90, %cst_44 {dimension_numbers = #tpu.dot_dimension_numbers<[1], [0], [0], [1], [0, 0, 1, 1], [], []>, precision = #tpu.contract_precision<fp32>} : vector<1x36xf32>, vector<36x256xf32>, vector<1x256xf32> -> vector<1x256xf32>
    %c0_45 = arith.constant 0 : index
    %c0_46 = arith.constant 0 : index
    %93 = vector.load %arg7[%c0_45, %c0_46] : memref<1x1xf32, #tpu.memory_space<vmem>>, vector<1x1xf32>
    %94 = vector.broadcast %93 : vector<1x1xf32> to vector<1x256xf32>
    %95 = arith.addf %92, %94 : vector<1x256xf32>
    %96 = arith.negf %95 : vector<1x256xf32>
    %97 = math.exp %96 : vector<1x256xf32>
    %cst_47 = arith.constant 1.000000e+00 : f32
    %98 = vector.broadcast %cst_47 : f32 to vector<1x256xf32>
    %99 = arith.addf %98, %97 : vector<1x256xf32>
    %100 = arith.divf %98, %99 : vector<1x256xf32>
    %c0_48 = arith.constant 0 : index
    %c0_49 = arith.constant 0 : index
    %c0_50 = arith.constant 0 : index
    %101 = vector.load %arg9[%c0_48, %c0_49, %c0_50] : memref<1x1x256xf32, #tpu.memory_space<vmem>>, vector<1x1x256xf32>
    %102 = vector.shape_cast %101 : vector<1x1x256xf32> to vector<1x256xf32>
    %103 = vector.shape_cast %100 : vector<1x256xf32> to vector<1x1x256xf32>
    tpu.vector_store %arg9[%c0_48, %c0_49, %c0_50], %103 {strides = array<i32>} : memref<1x1x256xf32, #tpu.memory_space<vmem>>, vector<1x1x256xf32>,
    %cst_51 = arith.constant 1.000000e+00 : f32
    %104 = vector.broadcast %cst_51 : f32 to vector<8x1xf32>
    %105 = arith.addf %104, %30 : vector<8x1xf32>
    %106 = vector.broadcast %105 : vector<8x1xf32> to vector<8x256xf32>
    %107 = vector.broadcast %100 : vector<1x256xf32> to vector<8x256xf32>
    %108 = arith.addf %106, %107 : vector<8x256xf32>
    %109 = arith.mulf %1, %108 : vector<8x256xf32>
    %c0_52 = arith.constant 0 : index
    %c0_53 = arith.constant 0 : index
    %c0_54 = arith.constant 0 : index
    %110 = vector.load %arg8[%c0_52, %c0_53, %c0_54] : memref<1x8x256xf32, #tpu.memory_space<vmem>>, vector<1x8x256xf32>
    %111 = vector.shape_cast %110 : vector<1x8x256xf32> to vector<8x256xf32>
    %112 = vector.shape_cast %109 : vector<8x256xf32> to vector<1x8x256xf32>
    tpu.vector_store %arg8[%c0_52, %c0_53, %c0_54], %112 {strides = array<i32>} : memref<1x8x256xf32, #tpu.memory_space<vmem>>, vector<1x8x256xf32>,
    return
  }
  func.func @transform_0(%arg0: i32) -> (i32, i32, i32) {
    %c0_i32 = arith.constant 0 : i32
    %c0_i32_0 = arith.constant 0 : i32
    %c0_i32_1 = arith.constant 0 : i32
    return %arg0, %c0_i32, %c0_i32_0 : i32, i32, i32
  }
  func.func @transform_1(%arg0: i32) -> (i32, i32) {
    %c0_i32 = arith.constant 0 : i32
    %c0_i32_0 = arith.constant 0 : i32
    %c0_i32_1 = arith.constant 0 : i32
    return %c0_i32, %c0_i32_0 : i32, i32
  }
  func.func @transform_2(%arg0: i32) -> (i32, i32) {
    %c0_i32 = arith.constant 0 : i32
    %c0_i32_0 = arith.constant 0 : i32
    %c0_i32_1 = arith.constant 0 : i32
    return %c0_i32, %c0_i32_0 : i32, i32
  }
  func.func @transform_3(%arg0: i32) -> (i32, i32) {
    %c0_i32 = arith.constant 0 : i32
    %c0_i32_0 = arith.constant 0 : i32
    %c0_i32_1 = arith.constant 0 : i32
    return %c0_i32, %c0_i32_0 : i32, i32
  }
  func.func @transform_4(%arg0: i32) -> (i32, i32) {
    %c0_i32 = arith.constant 0 : i32
    %c0_i32_0 = arith.constant 0 : i32
    %c0_i32_1 = arith.constant 0 : i32
    return %c0_i32, %c0_i32_0 : i32, i32
  }
  func.func @transform_5(%arg0: i32) -> (i32, i32) {
    %c0_i32 = arith.constant 0 : i32
    %c0_i32_0 = arith.constant 0 : i32
    %c0_i32_1 = arith.constant 0 : i32
    return %c0_i32, %c0_i32_0 : i32, i32
  }
  func.func @transform_6(%arg0: i32) -> (i32, i32) {
    %c0_i32 = arith.constant 0 : i32
    %c0_i32_0 = arith.constant 0 : i32
    %c0_i32_1 = arith.constant 0 : i32
    return %c0_i32, %c0_i32_0 : i32, i32
  }
  func.func @transform_7(%arg0: i32) -> (i32, i32, i32) {
    %c0_i32 = arith.constant 0 : i32
    %c0_i32_0 = arith.constant 0 : i32
    %c0_i32_1 = arith.constant 0 : i32
    return %arg0, %c0_i32, %c0_i32_0 : i32, i32, i32
  }
  func.func @transform_8(%arg0: i32) -> (i32, i32, i32) {
    %c0_i32 = arith.constant 0 : i32
    %c0_i32_0 = arith.constant 0 : i32
    %c0_i32_1 = arith.constant 0 : i32
    return %arg0, %c0_i32, %c0_i32_0 : i32, i32, i32
  }
}

</mosaic_0001>

<llo_original>
// kernel: tpu_custom_call.1
$region0: #{tpu_custom_call.1}
  #allocation0 [shape = 'u32[]', space=smem, size = 0x4, offset = 0x4, fixed_abs, tag = 'smem constant byte address 0x4 - core index']
  #allocation1 [shape = 'u32[144,128]{1,0:T(1,128)}', space=vmem, size = 0x12000, scoped, tag = 'internal scratch']
  #allocation2 [shape = 'f32[1,1]{1,0:T(1,128)S(1)}', space=vmem, size = 0x200, scoped, tag = 'scoped memory for tpu_custom_call.1']
  %s0 = inlined_call_operand.hbm [shape: f32[2,8,256], index: 0, kind: input, shape index: {}]
  %s1 = inlined_call_operand.vmem [shape: f32[4,8], index: 1, kind: input, shape index: {}]
  %s2 = inlined_call_operand.vmem [shape: f32[4,1], index: 2, kind: input, shape index: {}]
  %s3 = inlined_call_operand.vmem [shape: f32[4,36], index: 3, kind: input, shape index: {}]
  %s4 = inlined_call_operand.vmem [shape: f32[4,1], index: 4, kind: input, shape index: {}]
  %s5 = inlined_call_operand.vmem [shape: f32[1,36], index: 5, kind: input, shape index: {}]
  %s6 = inlined_call_operand.<no memory space> [shape: f32[1,1], index: 6, kind: input, shape index: {}]
  %s7 = inlined_call_operand.hbm [shape: f32[2,8,256], index: 7, kind: output, shape index: {0}]
  %s8 = inlined_call_operand.hbm [shape: f32[2,1,256], index: 8, kind: output, shape index: {1}]
  %9 = xla_tuple %s7, %s8
  %s10 = sld [smem:[#allocation0]]
  $region73: #{tpu_custom_call.1} parent=0
    _
  %s12 = ssub.s32 1, %s10
  %s13 = scalar_select 0, %s12, %s10
  %v14 = vstv %s6
  %15 = vst [vmem:[#allocation2] sm:$0x1] %v14
  $region1: #{tpu_custom_call.1} parent=0
    #allocation3 [shape = 'u8[16384]{0}', space=vmem, size = 0x4000, scoped, tag = 'input window, operand 0']
    #allocation4 [shape = 's32[2]{0}', space=sflag, size = 0x8, scoped, tag = 'scoped memory for tpu_custom_call.1']
    #allocation5 [shape = 's32[2]{0}', space=sflag, size = 0x8, scoped, tag = 'scoped memory for tpu_custom_call.1']
    #allocation6 [shape = 'u8[16384]{0}', space=vmem, size = 0x4000, scoped, tag = 'output window, operand 0']
    #allocation7 [shape = 'u8[2048]{0}', space=vmem, size = 0x800, scoped, tag = 'output window, operand 1']
    #allocation8 [shape = 's32[2]{0}', space=sflag, size = 0x8, scoped, tag = 'scoped memory for tpu_custom_call.1']
    %16 = vsyncpa [#allocation4], 0
    %s17 = scalar_lea.sflag [#allocation4], 1
    %18 = vsyncpa %s17, 0
    %19 = vsyncpa [#allocation5], 0
    %s20 = scalar_lea.sflag [#allocation5], 1
    %21 = vsyncpa %s20, 0
    %22 = vsyncpa [#allocation8], 0
    %s23 = scalar_lea.sflag [#allocation8], 1
    %24 = vsyncpa %s23, 0
    loop: start=0, step=1, limit=4
    $region2: #{tpu_custom_call.1} parent=1 // loop_pre_header
      _
    $region3: #{tpu_custom_call.1} parent=1 // loop_header
      %s26 = sphi 0, %s30
      %p27 = scmp.ge.s32.totalorder %s26, 4
      %s36 = sphi 0, %s38
      %s39 = sphi 0, %s36
      %s40 = sphi 0, %s39
      %s56 = sphi 0, %s40
      %s60 = sphi 0, %s60
      %s62 = sphi 0, %s60
      %s63 = sphi 0, %s62
      %s77 = sphi 0, %s63
      %s81 = sphi 0, %s81
      %s83 = sphi 0, %s81
      %s84 = sphi 0, %s83
      %s98 = sphi 0, %s84
      %s102 = sphi 0, %s102
      %s104 = sphi 0, %s102
      %s105 = sphi 0, %s104
      %s119 = sphi 0, %s105
      %s123 = sphi 0, %s123
      %s125 = sphi 0, %s123
      %s126 = sphi 0, %s125
      %s140 = sphi 0, %s126
      %s144 = sphi 0, %s144
      %s146 = sphi 0, %s144
      %s147 = sphi 0, %s146
      %s161 = sphi 0, %s147
      %s165 = sphi 0, %s165
      %s167 = sphi 0, %s165
      %s168 = sphi 0, %s167
      %s182 = sphi 0, %s168
      %s188 = sphi 0, %s190
      %s191 = sphi 0, %s188
      %s192 = sphi 0, %s191
      %s208 = sphi 0, %s192
      %s214 = sphi 0, %s216
      %s217 = sphi 0, %s214
      %s218 = sphi 0, %s217
      %s234 = sphi 0, %s218
    $region4: #{tpu_custom_call.1} parent=1 // loop_header_branch
      %29 = sbr.rel (%p27) target = $region8
    $region5: #{tpu_custom_call.1} parent=1 // loop_body
      %s31 = ssub.s32 %s26, 1
      %s32 = ssub.s32 %s26, 2
      %s33 = sadd.s32 %s26, 1
      %s34 = ssub.s32 %s26, %s33
      %p35 = scmp.eq.s32.totalorder %s34, 0
      %s37 = sadd.s32 %s36, 1
      %s38 = scalar_select %p35, %s36, %s37
      %p41 = pneg %p35
      %p42 = scmp.eq.s32.totalorder %s26, 1
      %p43 = por %p41, %p42
      %p44 = scmp.ne.s32.totalorder %s36, %s39
      %p45 = scmp.eq.s32.totalorder %s26, 0
      %p46 = por %p44, %p45
      %p47 = scmp.ne.s32.totalorder %s36, %s39
      %p48 = scmp.eq.s32.totalorder %s31, 1
      %p49 = por %p47, %p48
      %p50 = scmp.ne.s32.totalorder %s39, %s40
      %p51 = scmp.eq.s32.totalorder %s31, 0
      %p52 = por %p50, %p51
      %p53 = scmp.ne.s32.totalorder %s39, %s40
      %p54 = scmp.eq.s32.totalorder %s32, 1
      %p55 = por %p53, %p54
      %p57 = scmp.ne.s32.totalorder %s40, %s56
      %p58 = scmp.eq.s32.totalorder %s32, 0
      %p59 = por %p57, %p58
      %s61 = sadd.s32 %s60, 1
      %p64 = scmp.eq.s32.totalorder %s26, 1
      %p65 = scmp.ne.s32.totalorder %s60, %s62
      %p66 = scmp.eq.s32.totalorder %s26, 0
      %p67 = por %p65, %p66
      %p68 = scmp.ne.s32.totalorder %s60, %s62
      %p69 = scmp.eq.s32.totalorder %s31, 1
      %p70 = por %p68, %p69
      %p71 = scmp.ne.s32.totalorder %s62, %s63
      %p72 = scmp.eq.s32.totalorder %s31, 0
      %p73 = por %p71, %p72
      %p74 = scmp.ne.s32.totalorder %s62, %s63
      %p75 = scmp.eq.s32.totalorder %s32, 1
      %p76 = por %p74, %p75
      %p78 = scmp.ne.s32.totalorder %s63, %s77
      %p79 = scmp.eq.s32.totalorder %s32, 0
      %p80 = por %p78, %p79
      %s82 = sadd.s32 %s81, 1
      %p85 = scmp.eq.s32.totalorder %s26, 1
      %p86 = scmp.ne.s32.totalorder %s81, %s83
      %p87 = scmp.eq.s32.totalorder %s26, 0
      %p88 = por %p86, %p87
      %p89 = scmp.ne.s32.totalorder %s81, %s83
      %p90 = scmp.eq.s32.totalorder %s31, 1
      %p91 = por %p89, %p90
      %p92 = scmp.ne.s32.totalorder %s83, %s84
      %p93 = scmp.eq.s32.totalorder %s31, 0
      %p94 = por %p92, %p93
      %p95 = scmp.ne.s32.totalorder %s83, %s84
      %p96 = scmp.eq.s32.totalorder %s32, 1
      %p97 = por %p95, %p96
      %p99 = scmp.ne.s32.totalorder %s84, %s98
      %p100 = scmp.eq.s32.totalorder %s32, 0
      %p101 = por %p99, %p100
      %s103 = sadd.s32 %s102, 1
      %p106 = scmp.eq.s32.totalorder %s26, 1
      %p107 = scmp.ne.s32.totalorder %s102, %s104
      %p108 = scmp.eq.s32.totalorder %s26, 0
      %p109 = por %p107, %p108
      %p110 = scmp.ne.s32.totalorder %s102, %s104
      %p111 = scmp.eq.s32.totalorder %s31, 1
      %p112 = por %p110, %p111
      %p113 = scmp.ne.s32.totalorder %s104, %s105
      %p114 = scmp.eq.s32.totalorder %s31, 0
      %p115 = por %p113, %p114
      %p116 = scmp.ne.s32.totalorder %s104, %s105
      %p117 = scmp.eq.s32.totalorder %s32, 1
      %p118 = por %p116, %p117
      %p120 = scmp.ne.s32.totalorder %s105, %s119
      %p121 = scmp.eq.s32.totalorder %s32, 0
      %p122 = por %p120, %p121
      %s124 = sadd.s32 %s123, 1
      %p127 = scmp.eq.s32.totalorder %s26, 1
      %p128 = scmp.ne.s32.totalorder %s123, %s125
      %p129 = scmp.eq.s32.totalorder %s26, 0
      %p130 = por %p128, %p129
      %p131 = scmp.ne.s32.totalorder %s123, %s125
      %p132 = scmp.eq.s32.totalorder %s31, 1
      %p133 = por %p131, %p132
      %p134 = scmp.ne.s32.totalorder %s125, %s126
      %p135 = scmp.eq.s32.totalorder %s31, 0
      %p136 = por %p134, %p135
      %p137 = scmp.ne.s32.totalorder %s125, %s126
      %p138 = scmp.eq.s32.totalorder %s32, 1
      %p139 = por %p137, %p138
      %p141 = scmp.ne.s32.totalorder %s126, %s140
      %p142 = scmp.eq.s32.totalorder %s32, 0
      %p143 = por %p141, %p142
      %s145 = sadd.s32 %s144, 1
      %p148 = scmp.eq.s32.totalorder %s26, 1
      %p149 = scmp.ne.s32.totalorder %s144, %s146
      %p150 = scmp.eq.s32.totalorder %s26, 0
      %p151 = por %p149, %p150
      %p152 = scmp.ne.s32.totalorder %s144, %s146
      %p153 = scmp.eq.s32.totalorder %s31, 1
      %p154 = por %p152, %p153
      %p155 = scmp.ne.s32.totalorder %s146, %s147
      %p156 = scmp.eq.s32.totalorder %s31, 0
      %p157 = por %p155, %p156
      %p158 = scmp.ne.s32.totalorder %s146, %s147
      %p159 = scmp.eq.s32.totalorder %s32, 1
      %p160 = por %p158, %p159
      %p162 = scmp.ne.s32.totalorder %s147, %s161
      %p163 = scmp.eq.s32.totalorder %s32, 0
      %p164 = por %p162, %p163
      %s166 = sadd.s32 %s165, 1
      %p169 = scmp.eq.s32.totalorder %s26, 1
      %p170 = scmp.ne.s32.totalorder %s165, %s167
      %p171 = scmp.eq.s32.totalorder %s26, 0
      %p172 = por %p170, %p171
      %p173 = scmp.ne.s32.totalorder %s165, %s167
      %p174 = scmp.eq.s32.totalorder %s31, 1
      %p175 = por %p173, %p174
      %p176 = scmp.ne.s32.totalorder %s167, %s168
      %p177 = scmp.eq.s32.totalorder %s31, 0
      %p178 = por %p176, %p177
      %p179 = scmp.ne.s32.totalorder %s167, %s168
      %p180 = scmp.eq.s32.totalorder %s32, 1
      %p181 = por %p179, %p180
      %p183 = scmp.ne.s32.totalorder %s168, %s182
      %p184 = scmp.eq.s32.totalorder %s32, 0
      %p185 = por %p183, %p184
      %s186 = ssub.s32 %s26, %s33
      %p187 = scmp.eq.s32.totalorder %s186, 0
      %s189 = sadd.s32 %s188, 1
      %s190 = scalar_select %p187, %s188, %s189
      %p193 = pneg %p187
      %p194 = scmp.eq.s32.totalorder %s26, 1
      %p195 = por %p193, %p194
      %p196 = scmp.ne.s32.totalorder %s188, %s191
      %p197 = scmp.eq.s32.totalorder %s26, 0
      %p198 = por %p196, %p197
      %p199 = scmp.ne.s32.totalorder %s188, %s191
      %p200 = scmp.eq.s32.totalorder %s31, 1
      %p201 = por %p199, %p200
      %p202 = scmp.ne.s32.totalorder %s191, %s192
      %p203 = scmp.eq.s32.totalorder %s31, 0
      %p204 = por %p202, %p203
      %p205 = scmp.ne.s32.totalorder %s191, %s192
      %p206 = scmp.eq.s32.totalorder %s32, 1
      %p207 = por %p205, %p206
      %p209 = scmp.ne.s32.totalorder %s192, %s208
      %p210 = scmp.eq.s32.totalorder %s32, 0
      %p211 = por %p209, %p210
      %s212 = ssub.s32 %s26, %s33
      %p213 = scmp.eq.s32.totalorder %s212, 0
      %s215 = sadd.s32 %s214, 1
      %s216 = scalar_select %p213, %s214, %s215
      %p219 = pneg %p213
      %p220 = scmp.eq.s32.totalorder %s26, 1
      %p221 = por %p219, %p220
      %p222 = scmp.ne.s32.totalorder %s214, %s217
      %p223 = scmp.eq.s32.totalorder %s26, 0
      %p224 = por %p222, %p223
      %p225 = scmp.ne.s32.totalorder %s214, %s217
      %p226 = scmp.eq.s32.totalorder %s31, 1
      %p227 = por %p225, %p226
      %p228 = scmp.ne.s32.totalorder %s217, %s218
      %p229 = scmp.eq.s32.totalorder %s31, 0
      %p230 = por %p228, %p229
      %p231 = scmp.ne.s32.totalorder %s217, %s218
      %p232 = scmp.eq.s32.totalorder %s32, 1
      %p233 = por %p231, %p232
      %p235 = scmp.ne.s32.totalorder %s218, %s234
      %p236 = scmp.eq.s32.totalorder %s32, 0
      %p237 = por %p235, %p236
      %p238 = scmp.le.s32.totalorder 1, %s26
      %p239 = scmp.lt.s32.totalorder %s26, 3
      %p240 = pnand %p238, %p239
      %p241 = pneg %p240
      // Predicated region
      $region9: #{tpu_custom_call.1} parent=5 // pred_check
        _
      $region10: #{tpu_custom_call.1} parent=5 // pred_check_branch
        %243 = sbr.rel (%p240) target = $region12
      $region11: #{tpu_custom_call.1} parent=5 // pred_region
        %s244 = ssub.s32 %s26, 1
        // Predicated region
        $region13: #{tpu_custom_call.1} parent=11 // pred_check
          %p245 = pneg %p73
        $region14: #{tpu_custom_call.1} parent=11 // pred_check_branch
          %247 = sbr.rel (%p245) target = $region16
        $region15: #{tpu_custom_call.1} parent=11 // pred_region
          _
        $region16: #{tpu_custom_call.1} parent=11 // pred_fallthru
          _
        // Predicated region
        $region17: #{tpu_custom_call.1} parent=11 // pred_check
          %p248 = pneg %p94
        $region18: #{tpu_custom_call.1} parent=11 // pred_check_branch
          %250 = sbr.rel (%p248) target = $region20
        $region19: #{tpu_custom_call.1} parent=11 // pred_region
          _
        $region20: #{tpu_custom_call.1} parent=11 // pred_fallthru
          _
        // Predicated region
        $region21: #{tpu_custom_call.1} parent=11 // pred_check
          %p251 = pneg %p115
        $region22: #{tpu_custom_call.1} parent=11 // pred_check_branch
          %253 = sbr.rel (%p251) target = $region24
        $region23: #{tpu_custom_call.1} parent=11 // pred_region
          _
        $region24: #{tpu_custom_call.1} parent=11 // pred_fallthru
          _
        // Predicated region
        $region25: #{tpu_custom_call.1} parent=11 // pred_check
          %p254 = pneg %p136
        $region26: #{tpu_custom_call.1} parent=11 // pred_check_branch
          %256 = sbr.rel (%p254) target = $region28
        $region27: #{tpu_custom_call.1} parent=11 // pred_region
          _
        $region28: #{tpu_custom_call.1} parent=11 // pred_fallthru
          _
        // Predicated region
        $region29: #{tpu_custom_call.1} parent=11 // pred_check
          %p257 = pneg %p157
        $region30: #{tpu_custom_call.1} parent=11 // pred_check_branch
          %259 = sbr.rel (%p257) target = $region32
        $region31: #{tpu_custom_call.1} parent=11 // pred_region
          _
        $region32: #{tpu_custom_call.1} parent=11 // pred_fallthru
          _
        // Predicated region
        $region33: #{tpu_custom_call.1} parent=11 // pred_check
          %p260 = pneg %p178
        $region34: #{tpu_custom_call.1} parent=11 // pred_check_branch
          %262 = sbr.rel (%p260) target = $region36
        $region35: #{tpu_custom_call.1} parent=11 // pred_region
          _
        $region36: #{tpu_custom_call.1} parent=11 // pred_fallthru
          _
      $region12: #{tpu_custom_call.1} parent=5 // pred_fallthru
        _
      %p263 = scmp.lt.s32.totalorder %s26, 2
      // Predicated region
      $region37: #{tpu_custom_call.1} parent=5 // pred_check
        %p264 = pneg %p263
      $region38: #{tpu_custom_call.1} parent=5 // pred_check_branch
        %266 = sbr.rel (%p264) target = $region40
      $region39: #{tpu_custom_call.1} parent=5 // pred_region
        // Predicated region
        $region41: #{tpu_custom_call.1} parent=39 // pred_check
          %p267 = pneg %p46
        $region42: #{tpu_custom_call.1} parent=39 // pred_check_branch
          %269 = sbr.rel (%p267) target = $region44
        $region43: #{tpu_custom_call.1} parent=39 // pred_region
          %s270 = sand.u32 %s36, 1
          %s271 = scalar_lea.sflag [#allocation4], %s270
          %s272 = sand.u32 %s36, 1
          %s273 = smul.addr %s272, 16
          %s274 = scalar_lea.vmem [#allocation3], %s273
          %s276 = ssub.s32 256, 256
          %277 = vsyncadd %s271, %s276
          %s278 = smul.addr %s26, 2
          %s279 = smul.addr %s278, 128
          %s280 = scalar_lea.hbm %s0, %s279
          %s282 = sshll.u32 %s274, 4
          %s283 = int_to_ptr.vmem [resolvable:$true] %s282
          %285 = dma.hbm_to_vmem [thread:$0]  %s280, 256, %s283, %s271
        $region44: #{tpu_custom_call.1} parent=39 // pred_fallthru
          _
      $region40: #{tpu_custom_call.1} parent=5 // pred_fallthru
        _
      %p286 = scmp.le.s32.totalorder 1, %s26
      %p287 = scmp.lt.s32.totalorder %s26, 3
      %p288 = pnand %p286, %p287
      %p289 = pneg %p288
      // Predicated region
      $region45: #{tpu_custom_call.1} parent=5 // pred_check
        _
      $region46: #{tpu_custom_call.1} parent=5 // pred_check_branch
        %291 = sbr.rel (%p288) target = $region48
      $region47: #{tpu_custom_call.1} parent=5 // pred_region
        %s292 = ssub.s32 %s26, 1
        %s293 = sand.u32 %s39, 1
        %s294 = scalar_lea.sflag [#allocation4], %s293
        %s295 = sand.u32 %s39, 1
        %s296 = smul.addr %s295, 16
        %s297 = scalar_lea.vmem [#allocation3], %s296
        // Predicated region
        $region49: #{tpu_custom_call.1} parent=47 // pred_check
          %p298 = pneg %p52
        $region50: #{tpu_custom_call.1} parent=47 // pred_check_branch
          %300 = sbr.rel (%p298) target = $region52
        $region51: #{tpu_custom_call.1} parent=47 // pred_region
          %301 = dma.done %s294, 256
        $region52: #{tpu_custom_call.1} parent=47 // pred_fallthru
          _
        %s302 = sand.u32 %s39, 1
        %s303 = scalar_lea.sflag [#allocation4], %s302
        %s304 = sand.u32 %s39, 1
        %s305 = smul.addr %s304, 16
        %s306 = scalar_lea.vmem [#allocation3], %s305
        %p307 = pneg %p52
        %p308 = pneg %p49
        %p309 = pneg %p73
        %p310 = pneg %p70
        %p311 = pneg %p94
        %p312 = pneg %p91
        %p313 = pneg %p115
        %p314 = pneg %p112
        %p315 = pneg %p136
        %p316 = pneg %p133
        %p317 = pneg %p157
        %p318 = pneg %p154
        %p319 = pneg %p178
        %p320 = pneg %p175
        %p321 = pneg %p204
        %p322 = pneg %p201
        %s323 = sand.u32 %s191, 1
        %s324 = scalar_lea.sflag [#allocation5], %s323
        %s325 = sand.u32 %s191, 1
        %s326 = smul.addr %s325, 16
        %s327 = scalar_lea.vmem [#allocation6], %s326
        %p328 = pneg %p230
        %p329 = pneg %p227
        %s330 = sand.u32 %s217, 1
        %s331 = scalar_lea.sflag [#allocation8], %s330
        %s332 = sand.u32 %s217, 1
        %s333 = smul.addr %s332, 2
        %s334 = scalar_lea.vmem [#allocation7], %s333
        %v335 = vld [vmem:[%s297] sm:$0xff]
        %v336 = vld [vmem:[%s297 + $0x8] sm:$0xff]
        %v337 = vlaneseq
        %v338 = vand.u32 %v337, 127
        %v339 = vadd.s32 %v338, 128
        %v340 = vand.u32 %v338, 15
        %v341 = vand.u32 %v339, 15
        %vm342 = vcmp.ge.s32.totalorder %v338, 64
        %vm343 = vcmp.ge.s32.totalorder %v339, 64
        %vm344 = vcmp.lt.s32.totalorder %v338, 192
        %vm345 = vcmp.lt.s32.totalorder %v339, 192
        %vm346 = vcmp.ge.s32.totalorder %v340, 4
        %vm347 = vcmp.ge.s32.totalorder %v341, 4
        %vm348 = vcmp.lt.s32.totalorder %v340, 12
        %vm349 = vcmp.lt.s32.totalorder %v341, 12
        %vm350 = vmand %vm342, %vm346
        %vm351 = vmand %vm343, %vm347
        %vm352 = vmand %vm342, %vm348
        %vm353 = vmand %vm343, %vm349
        %vm354 = vmand %vm344, %vm346
        %vm355 = vmand %vm345, %vm347
        %vm356 = vmand %vm344, %vm348
        %vm357 = vmand %vm345, %vm349
        %v358 = vadd.f32 %v335, %v336
        %359 = vadd.xlane.f32.xlu0 %v358
        %v360 = vpop.xlane.xlu0 %359
        %v361 = vrcp.pop 256.0
        %v362 = vmul.f32 %v360, %v361
        %v363 = vxor.u32 %v362, 2147483648
        %v364 = vmul.f32 %v363, 1.442695
        %v365 = vpow.pop %v364
        %v366 = vadd.f32 %v365, 1.0
        %v367 = vrcp.pop %v366
        %v368 = vmul.f32 1.0, %v367
        %v369 = vxor.u32 %v368, 2147483648
        %v370 = vmul.f32 %v369, 1.442695
        %v371 = vpow.pop %v370
        %v372 = vadd.f32 %v371, 1.0
        %v373 = vrcp.pop %v372
        %v374 = vmul.f32 1.0, %v373
        %v375 = vld [vmem:[%s1] sm:$0xf]
        %v376 = vld [vmem:[%s2] sm:$0xf]
        %378 = vset.pattern.permute.xlu0 0
        %379 = vperm.xlu0 %378, %v376
        %v380 = vpop.permute.xlu0 %379
        %vm382 = vcmask 64512
        %v384 = vsel %vm382, %v375, 0
        %386 = vmatprep.subr.mxu0 0.0
        %387 = vmatpush1.msra.mxu0 0.0
        %388 = vmatprep.subr.mxu0 0.0
        %389 = vmatpush1.msra.mxu0 0.0
        %390 = vmatprep.subr.mxu0 0.0
        %391 = vmatpush1.msra.mxu0 0.0
        %392 = vmatprep.subr.mxu0 0.0
        %393 = vmatpush1.msra.mxu0 0.0
        %394 = vmatprep.subr.mxu0 0.0
        %395 = vmatpush1.msra.mxu0 0.0
        %396 = vmatprep.subr.mxu0 0.0
        %397 = vmatpush1.msra.mxu0 0.0
        %398 = vmatprep.subr.mxu0 0.0
        %399 = vmatpush1.msra.mxu0 0.0
        %400 = vmatprep.subr.mxu0 0.0
        %401 = vmatpush1.msra.mxu0 0.0
        %402 = vmatprep.subr.mxu0 0.0
        %403 = vmatpush1.msra.mxu0 0.0
        %404 = vmatprep.subr.mxu0 0.0
        %405 = vmatpush1.msra.mxu0 0.0
        %406 = vmatprep.subr.mxu0 0.0
        %407 = vmatpush1.msra.mxu0 0.0
        %408 = vmatprep.subr.mxu0 0.0
        %409 = vmatpush1.msra.mxu0 0.0
        %410 = vmatprep.subr.mxu0 0.0
        %411 = vmatpush1.msra.mxu0 0.0
        %412 = vmatprep.subr.mxu0 0.0
        %413 = vmatpush1.msra.mxu0 0.0
        %414 = vmatprep.subr.mxu0 0.0
        %415 = vmatpush1.msra.mxu0 0.0
        %v416 = vand.u32 %v336, 4294901760
        %417 = vmatprep.subr.mxu0 %v416
        %v418 = vand.u32 %v335, 4294901760
        %419 = vmatpush1.msra.mxu0 %v418
        %420 = vmatprep.subr.mxu0 0.0
        %421 = vmatpush2.msra.mxu0 0.0
        %422 = vmatprep.subr.mxu0 0.0
        %423 = vmatpush2.msra.mxu0 0.0
        %424 = vmatprep.subr.mxu0 0.0
        %425 = vmatpush2.msra.mxu0 0.0
        %426 = vmatprep.subr.mxu0 0.0
        %427 = vmatpush2.msra.mxu0 0.0
        %428 = vmatprep.subr.mxu0 0.0
        %429 = vmatpush2.msra.mxu0 0.0
        %430 = vmatprep.subr.mxu0 0.0
        %431 = vmatpush2.msra.mxu0 0.0
        %432 = vmatprep.subr.mxu0 0.0
        %433 = vmatpush2.msra.mxu0 0.0
        %434 = vmatprep.subr.mxu0 0.0
        %435 = vmatpush2.msra.mxu0 0.0
        %436 = vmatprep.subr.mxu0 0.0
        %437 = vmatpush2.msra.mxu0 0.0
        %438 = vmatprep.subr.mxu0 0.0
        %439 = vmatpush2.msra.mxu0 0.0
        %440 = vmatprep.subr.mxu0 0.0
        %441 = vmatpush2.msra.mxu0 0.0
        %442 = vmatprep.subr.mxu0 0.0
        %443 = vmatpush2.msra.mxu0 0.0
        %444 = vmatprep.subr.mxu0 0.0
        %445 = vmatpush2.msra.mxu0 0.0
        %446 = vmatprep.subr.mxu0 0.0
        %447 = vmatpush2.msra.mxu0 0.0
        %448 = vmatprep.subr.mxu0 0.0
        %449 = vmatpush2.msra.mxu0 0.0
        %450 = vmatprep.subr.mxu0 0.0
        %451 = vmatpush2.msra.mxu0 0.0
        %452 = vmatprep.mubr.f32.mxu0 0.0
        %v453 = vand.u32 %v384, 4294901760
        %v454 = vsub.f32 %v384, %v453
        %v455 = vand.u32 %v454, 4294901760
        %v456 = vsub.f32 %v454, %v455
        %v457 = vand.u32 %v456, 4294901760
        %458 = vmatmul.mubr.f32.gmra.mxu0 %v457
        %v459 = vpop.f32.mrf.mxu0
        %v460 = vadd.f32 %v380, %v459
        %v461 = vpop.f32.mrf.mxu0
        %v462 = vadd.f32 %v380, %v461
        %463 = vdwg.mxu0
        %464 = vmatprep.subr.mxu0 0.0
        %465 = vmatpush1.msra.mxu0 0.0
        %466 = vmatprep.subr.mxu0 0.0
        %467 = vmatpush1.msra.mxu0 0.0
        %468 = vmatprep.subr.mxu0 0.0
        %469 = vmatpush1.msra.mxu0 0.0
        %470 = vmatprep.subr.mxu0 0.0
        %471 = vmatpush1.msra.mxu0 0.0
        %472 = vmatprep.subr.mxu0 0.0
        %473 = vmatpush1.msra.mxu0 0.0
        %474 = vmatprep.subr.mxu0 0.0
        %475 = vmatpush1.msra.mxu0 0.0
        %476 = vmatprep.subr.mxu0 0.0
        %477 = vmatpush1.msra.mxu0 0.0
        %478 = vmatprep.subr.mxu0 0.0
        %479 = vmatpush1.msra.mxu0 0.0
        %480 = vmatprep.subr.mxu0 0.0
        %481 = vmatpush1.msra.mxu0 0.0
        %482 = vmatprep.subr.mxu0 0.0
        %483 = vmatpush1.msra.mxu0 0.0
        %484 = vmatprep.subr.mxu0 0.0
        %485 = vmatpush1.msra.mxu0 0.0
        %486 = vmatprep.subr.mxu0 0.0
        %487 = vmatpush1.msra.mxu0 0.0
        %488 = vmatprep.subr.mxu0 0.0
        %489 = vmatpush1.msra.mxu0 0.0
        %490 = vmatprep.subr.mxu0 0.0
        %491 = vmatpush1.msra.mxu0 0.0
        %492 = vmatprep.subr.mxu0 0.0
        %493 = vmatpush1.msra.mxu0 0.0
        %v494 = vand.u32 %v336, 4294901760
        %v495 = vsub.f32 %v336, %v494
        %v496 = vand.u32 %v495, 4294901760
        %v497 = vsub.f32 %v495, %v496
        %v498 = vand.u32 %v497, 4294901760
        %499 = vmatprep.subr.mxu0 %v498
        %v500 = vand.u32 %v335, 4294901760
        %v501 = vsub.f32 %v335, %v500
        %v502 = vand.u32 %v501, 4294901760
        %v503 = vsub.f32 %v501, %v502
        %v504 = vand.u32 %v503, 4294901760
        %505 = vmatpush1.msra.mxu0 %v504
        %506 = vmatprep.subr.mxu0 0.0
        %507 = vmatpush2.msra.mxu0 0.0
        %508 = vmatprep.subr.mxu0 0.0
        %509 = vmatpush2.msra.mxu0 0.0
        %510 = vmatprep.subr.mxu0 0.0
        %511 = vmatpush2.msra.mxu0 0.0
        %512 = vmatprep.subr.mxu0 0.0
        %513 = vmatpush2.msra.mxu0 0.0
        %514 = vmatprep.subr.mxu0 0.0
        %515 = vmatpush2.msra.mxu0 0.0
        %516 = vmatprep.subr.mxu0 0.0
        %517 = vmatpush2.msra.mxu0 0.0
        %518 = vmatprep.subr.mxu0 0.0
        %519 = vmatpush2.msra.mxu0 0.0
        %520 = vmatprep.subr.mxu0 0.0
        %521 = vmatpush2.msra.mxu0 0.0
        %522 = vmatprep.subr.mxu0 0.0
        %523 = vmatpush2.msra.mxu0 0.0
        %524 = vmatprep.subr.mxu0 0.0
        %525 = vmatpush2.msra.mxu0 0.0
        %526 = vmatprep.subr.mxu0 0.0
        %527 = vmatpush2.msra.mxu0 0.0
        %528 = vmatprep.subr.mxu0 0.0
        %529 = vmatpush2.msra.mxu0 0.0
        %530 = vmatprep.subr.mxu0 0.0
        %531 = vmatpush2.msra.mxu0 0.0
        %532 = vmatprep.subr.mxu0 0.0
        %533 = vmatpush2.msra.mxu0 0.0
        %534 = vmatprep.subr.mxu0 0.0
        %535 = vmatpush2.msra.mxu0 0.0
        %536 = vmatprep.subr.mxu0 0.0
        %537 = vmatpush2.msra.mxu0 0.0
        %538 = vmatprep.mubr.f32.mxu0 0.0
        %v539 = vand.u32 %v384, 4294901760
        %540 = vmatmul.mubr.f32.gmra.mxu0 %v539
        %v541 = vpop.f32.mrf.mxu0
        %v542 = vadd.f32 %v460, %v541
        %v543 = vpop.f32.mrf.mxu0
        %v544 = vadd.f32 %v462, %v543
        %545 = vdwg.mxu0
        %546 = vmatprep.subr.mxu0 0.0
        %547 = vmatpush1.msra.mxu0 0.0
        %548 = vmatprep.subr.mxu0 0.0
        %549 = vmatpush1.msra.mxu0 0.0
        %550 = vmatprep.subr.mxu0 0.0
        %551 = vmatpush1.msra.mxu0 0.0
        %552 = vmatprep.subr.mxu0 0.0
        %553 = vmatpush1.msra.mxu0 0.0
        %554 = vmatprep.subr.mxu0 0.0
        %555 = vmatpush1.msra.mxu0 0.0
        %556 = vmatprep.subr.mxu0 0.0
        %557 = vmatpush1.msra.mxu0 0.0
        %558 = vmatprep.subr.mxu0 0.0
        %559 = vmatpush1.msra.mxu0 0.0
        %560 = vmatprep.subr.mxu0 0.0
        %561 = vmatpush1.msra.mxu0 0.0
        %562 = vmatprep.subr.mxu0 0.0
        %563 = vmatpush1.msra.mxu0 0.0
        %564 = vmatprep.subr.mxu0 0.0
        %565 = vmatpush1.msra.mxu0 0.0
        %566 = vmatprep.subr.mxu0 0.0
        %567 = vmatpush1.msra.mxu0 0.0
        %568 = vmatprep.subr.mxu0 0.0
        %569 = vmatpush1.msra.mxu0 0.0
        %570 = vmatprep.subr.mxu0 0.0
        %571 = vmatpush1.msra.mxu0 0.0
        %572 = vmatprep.subr.mxu0 0.0
        %573 = vmatpush1.msra.mxu0 0.0
        %574 = vmatprep.subr.mxu0 0.0
        %575 = vmatpush1.msra.mxu0 0.0
        %v576 = vand.u32 %v336, 4294901760
        %v577 = vsub.f32 %v336, %v576
        %578 = vmatprep.subr.mxu0 %v577
        %v579 = vand.u32 %v335, 4294901760
        %v580 = vsub.f32 %v335, %v579
        %581 = vmatpush1.msra.mxu0 %v580
        %582 = vmatprep.subr.mxu0 0.0
        %583 = vmatpush2.msra.mxu0 0.0
        %584 = vmatprep.subr.mxu0 0.0
        %585 = vmatpush2.msra.mxu0 0.0
        %586 = vmatprep.subr.mxu0 0.0
        %587 = vmatpush2.msra.mxu0 0.0
        %588 = vmatprep.subr.mxu0 0.0
        %589 = vmatpush2.msra.mxu0 0.0
        %590 = vmatprep.subr.mxu0 0.0
        %591 = vmatpush2.msra.mxu0 0.0
        %592 = vmatprep.subr.mxu0 0.0
        %593 = vmatpush2.msra.mxu0 0.0
        %594 = vmatprep.subr.mxu0 0.0
        %595 = vmatpush2.msra.mxu0 0.0
        %596 = vmatprep.subr.mxu0 0.0
        %597 = vmatpush2.msra.mxu0 0.0
        %598 = vmatprep.subr.mxu0 0.0
        %599 = vmatpush2.msra.mxu0 0.0
        %600 = vmatprep.subr.mxu0 0.0
        %601 = vmatpush2.msra.mxu0 0.0
        %602 = vmatprep.subr.mxu0 0.0
        %603 = vmatpush2.msra.mxu0 0.0
        %604 = vmatprep.subr.mxu0 0.0
        %605 = vmatpush2.msra.mxu0 0.0
        %606 = vmatprep.subr.mxu0 0.0
        %607 = vmatpush2.msra.mxu0 0.0
        %608 = vmatprep.subr.mxu0 0.0
        %609 = vmatpush2.msra.mxu0 0.0
        %610 = vmatprep.subr.mxu0 0.0
        %611 = vmatpush2.msra.mxu0 0.0
        %612 = vmatprep.subr.mxu0 0.0
        %613 = vmatpush2.msra.mxu0 0.0
        %614 = vmatprep.mubr.f32.mxu0 0.0
        %v615 = vand.u32 %v384, 4294901760
        %v616 = vsub.f32 %v384, %v615
        %617 = vmatmul.mubr.f32.gmra.mxu0 %v616
        %v618 = vpop.f32.mrf.mxu0
        %v619 = vadd.f32 %v542, %v618
        %v620 = vpop.f32.mrf.mxu0
        %v621 = vadd.f32 %v544, %v620
        %622 = vdwg.mxu0
        %623 = vmatprep.subr.mxu0 0.0
        %624 = vmatpush1.msra.mxu0 0.0
        %625 = vmatprep.subr.mxu0 0.0
        %626 = vmatpush1.msra.mxu0 0.0
        %627 = vmatprep.subr.mxu0 0.0
        %628 = vmatpush1.msra.mxu0 0.0
        %629 = vmatprep.subr.mxu0 0.0
        %630 = vmatpush1.msra.mxu0 0.0
        %631 = vmatprep.subr.mxu0 0.0
        %632 = vmatpush1.msra.mxu0 0.0
        %633 = vmatprep.subr.mxu0 0.0
        %634 = vmatpush1.msra.mxu0 0.0
        %635 = vmatprep.subr.mxu0 0.0
        %636 = vmatpush1.msra.mxu0 0.0
        %637 = vmatprep.subr.mxu0 0.0
        %638 = vmatpush1.msra.mxu0 0.0
        %639 = vmatprep.subr.mxu0 0.0
        %640 = vmatpush1.msra.mxu0 0.0
        %641 = vmatprep.subr.mxu0 0.0
        %642 = vmatpush1.msra.mxu0 0.0
        %643 = vmatprep.subr.mxu0 0.0
        %644 = vmatpush1.msra.mxu0 0.0
        %645 = vmatprep.subr.mxu0 0.0
        %646 = vmatpush1.msra.mxu0 0.0
        %647 = vmatprep.subr.mxu0 0.0
        %648 = vmatpush1.msra.mxu0 0.0
        %649 = vmatprep.subr.mxu0 0.0
        %650 = vmatpush1.msra.mxu0 0.0
        %651 = vmatprep.subr.mxu0 0.0
        %652 = vmatpush1.msra.mxu0 0.0
        %v653 = vand.u32 %v336, 4294901760
        %654 = vmatprep.subr.mxu0 %v653
        %v655 = vand.u32 %v335, 4294901760
        %656 = vmatpush1.msra.mxu0 %v655
        %657 = vmatprep.subr.mxu0 0.0
        %658 = vmatpush2.msra.mxu0 0.0
        %659 = vmatprep.subr.mxu0 0.0
        %660 = vmatpush2.msra.mxu0 0.0
        %661 = vmatprep.subr.mxu0 0.0
        %662 = vmatpush2.msra.mxu0 0.0
        %663 = vmatprep.subr.mxu0 0.0
        %664 = vmatpush2.msra.mxu0 0.0
        %665 = vmatprep.subr.mxu0 0.0
        %666 = vmatpush2.msra.mxu0 0.0
        %667 = vmatprep.subr.mxu0 0.0
        %668 = vmatpush2.msra.mxu0 0.0
        %669 = vmatprep.subr.mxu0 0.0
        %670 = vmatpush2.msra.mxu0 0.0
        %671 = vmatprep.subr.mxu0 0.0
        %672 = vmatpush2.msra.mxu0 0.0
        %673 = vmatprep.subr.mxu0 0.0
        %674 = vmatpush2.msra.mxu0 0.0
        %675 = vmatprep.subr.mxu0 0.0
        %676 = vmatpush2.msra.mxu0 0.0
        %677 = vmatprep.subr.mxu0 0.0
        %678 = vmatpush2.msra.mxu0 0.0
        %679 = vmatprep.subr.mxu0 0.0
        %680 = vmatpush2.msra.mxu0 0.0
        %681 = vmatprep.subr.mxu0 0.0
        %682 = vmatpush2.msra.mxu0 0.0
        %683 = vmatprep.subr.mxu0 0.0
        %684 = vmatpush2.msra.mxu0 0.0
        %685 = vmatprep.subr.mxu0 0.0
        %686 = vmatpush2.msra.mxu0 0.0
        %687 = vmatprep.subr.mxu0 0.0
        %688 = vmatpush2.msra.mxu0 0.0
        %689 = vmatprep.mubr.f32.mxu0 0.0
        %v690 = vand.u32 %v384, 4294901760
        %v691 = vsub.f32 %v384, %v690
        %v692 = vand.u32 %v691, 4294901760
        %693 = vmatmul.mubr.f32.gmra.mxu0 %v692
        %v694 = vpop.f32.mrf.mxu0
        %v695 = vadd.f32 %v619, %v694
        %v696 = vpop.f32.mrf.mxu0
        %v697 = vadd.f32 %v621, %v696
        %698 = vdwg.mxu0
        %699 = vmatprep.subr.mxu0 0.0
        %700 = vmatpush1.msra.mxu0 0.0
        %701 = vmatprep.subr.mxu0 0.0
        %702 = vmatpush1.msra.mxu0 0.0
        %703 = vmatprep.subr.mxu0 0.0
        %704 = vmatpush1.msra.mxu0 0.0
        %705 = vmatprep.subr.mxu0 0.0
        %706 = vmatpush1.msra.mxu0 0.0
        %707 = vmatprep.subr.mxu0 0.0
        %708 = vmatpush1.msra.mxu0 0.0
        %709 = vmatprep.subr.mxu0 0.0
        %710 = vmatpush1.msra.mxu0 0.0
        %711 = vmatprep.subr.mxu0 0.0
        %712 = vmatpush1.msra.mxu0 0.0
        %713 = vmatprep.subr.mxu0 0.0
        %714 = vmatpush1.msra.mxu0 0.0
        %715 = vmatprep.subr.mxu0 0.0
        %716 = vmatpush1.msra.mxu0 0.0
        %717 = vmatprep.subr.mxu0 0.0
        %718 = vmatpush1.msra.mxu0 0.0
        %719 = vmatprep.subr.mxu0 0.0
        %720 = vmatpush1.msra.mxu0 0.0
        %721 = vmatprep.subr.mxu0 0.0
        %722 = vmatpush1.msra.mxu0 0.0
        %723 = vmatprep.subr.mxu0 0.0
        %724 = vmatpush1.msra.mxu0 0.0
        %725 = vmatprep.subr.mxu0 0.0
        %726 = vmatpush1.msra.mxu0 0.0
        %727 = vmatprep.subr.mxu0 0.0
        %728 = vmatpush1.msra.mxu0 0.0
        %v729 = vand.u32 %v336, 4294901760
        %v730 = vsub.f32 %v336, %v729
        %v731 = vand.u32 %v730, 4294901760
        %732 = vmatprep.subr.mxu0 %v731
        %v733 = vand.u32 %v335, 4294901760
        %v734 = vsub.f32 %v335, %v733
        %v735 = vand.u32 %v734, 4294901760
        %736 = vmatpush1.msra.mxu0 %v735
        %737 = vmatprep.subr.mxu0 0.0
        %738 = vmatpush2.msra.mxu0 0.0
        %739 = vmatprep.subr.mxu0 0.0
        %740 = vmatpush2.msra.mxu0 0.0
        %741 = vmatprep.subr.mxu0 0.0
        %742 = vmatpush2.msra.mxu0 0.0
        %743 = vmatprep.subr.mxu0 0.0
        %744 = vmatpush2.msra.mxu0 0.0
        %745 = vmatprep.subr.mxu0 0.0
        %746 = vmatpush2.msra.mxu0 0.0
        %747 = vmatprep.subr.mxu0 0.0
        %748 = vmatpush2.msra.mxu0 0.0
        %749 = vmatprep.subr.mxu0 0.0
        %750 = vmatpush2.msra.mxu0 0.0
        %751 = vmatprep.subr.mxu0 0.0
        %752 = vmatpush2.msra.mxu0 0.0
        %753 = vmatprep.subr.mxu0 0.0
        %754 = vmatpush2.msra.mxu0 0.0
        %755 = vmatprep.subr.mxu0 0.0
        %756 = vmatpush2.msra.mxu0 0.0
        %757 = vmatprep.subr.mxu0 0.0
        %758 = vmatpush2.msra.mxu0 0.0
        %759 = vmatprep.subr.mxu0 0.0
        %760 = vmatpush2.msra.mxu0 0.0
        %761 = vmatprep.subr.mxu0 0.0
        %762 = vmatpush2.msra.mxu0 0.0
        %763 = vmatprep.subr.mxu0 0.0
        %764 = vmatpush2.msra.mxu0 0.0
        %765 = vmatprep.subr.mxu0 0.0
        %766 = vmatpush2.msra.mxu0 0.0
        %767 = vmatprep.subr.mxu0 0.0
        %768 = vmatpush2.msra.mxu0 0.0
        %769 = vmatprep.mubr.f32.mxu0 0.0
        %v770 = vand.u32 %v384, 4294901760
        %771 = vmatmul.mubr.f32.gmra.mxu0 %v770
        %v772 = vpop.f32.mrf.mxu0
        %v773 = vadd.f32 %v695, %v772
        %v774 = vpop.f32.mrf.mxu0
        %v775 = vadd.f32 %v697, %v774
        %776 = vdwg.mxu0
        %777 = vmatprep.subr.mxu0 0.0
        %778 = vmatpush1.msra.mxu0 0.0
        %779 = vmatprep.subr.mxu0 0.0
        %780 = vmatpush1.msra.mxu0 0.0
        %781 = vmatprep.subr.mxu0 0.0
        %782 = vmatpush1.msra.mxu0 0.0
        %783 = vmatprep.subr.mxu0 0.0
        %784 = vmatpush1.msra.mxu0 0.0
        %785 = vmatprep.subr.mxu0 0.0
        %786 = vmatpush1.msra.mxu0 0.0
        %787 = vmatprep.subr.mxu0 0.0
        %788 = vmatpush1.msra.mxu0 0.0
        %789 = vmatprep.subr.mxu0 0.0
        %790 = vmatpush1.msra.mxu0 0.0
        %791 = vmatprep.subr.mxu0 0.0
        %792 = vmatpush1.msra.mxu0 0.0
        %793 = vmatprep.subr.mxu0 0.0
        %794 = vmatpush1.msra.mxu0 0.0
        %795 = vmatprep.subr.mxu0 0.0
        %796 = vmatpush1.msra.mxu0 0.0
        %797 = vmatprep.subr.mxu0 0.0
        %798 = vmatpush1.msra.mxu0 0.0
        %799 = vmatprep.subr.mxu0 0.0
        %800 = vmatpush1.msra.mxu0 0.0
        %801 = vmatprep.subr.mxu0 0.0
        %802 = vmatpush1.msra.mxu0 0.0
        %803 = vmatprep.subr.mxu0 0.0
        %804 = vmatpush1.msra.mxu0 0.0
        %805 = vmatprep.subr.mxu0 0.0
        %806 = vmatpush1.msra.mxu0 0.0
        %v807 = vand.u32 %v336, 4294901760
        %808 = vmatprep.subr.mxu0 %v807
        %v809 = vand.u32 %v335, 4294901760
        %810 = vmatpush1.msra.mxu0 %v809
        %811 = vmatprep.subr.mxu0 0.0
        %812 = vmatpush2.msra.mxu0 0.0
        %813 = vmatprep.subr.mxu0 0.0
        %814 = vmatpush2.msra.mxu0 0.0
        %815 = vmatprep.subr.mxu0 0.0
        %816 = vmatpush2.msra.mxu0 0.0
        %817 = vmatprep.subr.mxu0 0.0
        %818 = vmatpush2.msra.mxu0 0.0
        %819 = vmatprep.subr.mxu0 0.0
        %820 = vmatpush2.msra.mxu0 0.0
        %821 = vmatprep.subr.mxu0 0.0
        %822 = vmatpush2.msra.mxu0 0.0
        %823 = vmatprep.subr.mxu0 0.0
        %824 = vmatpush2.msra.mxu0 0.0
        %825 = vmatprep.subr.mxu0 0.0
        %826 = vmatpush2.msra.mxu0 0.0
        %827 = vmatprep.subr.mxu0 0.0
        %828 = vmatpush2.msra.mxu0 0.0
        %829 = vmatprep.subr.mxu0 0.0
        %830 = vmatpush2.msra.mxu0 0.0
        %831 = vmatprep.subr.mxu0 0.0
        %832 = vmatpush2.msra.mxu0 0.0
        %833 = vmatprep.subr.mxu0 0.0
        %834 = vmatpush2.msra.mxu0 0.0
        %835 = vmatprep.subr.mxu0 0.0
        %836 = vmatpush2.msra.mxu0 0.0
        %837 = vmatprep.subr.mxu0 0.0
        %838 = vmatpush2.msra.mxu0 0.0
        %839 = vmatprep.subr.mxu0 0.0
        %840 = vmatpush2.msra.mxu0 0.0
        %841 = vmatprep.subr.mxu0 0.0
        %842 = vmatpush2.msra.mxu0 0.0
        %843 = vmatprep.mubr.f32.mxu0 0.0
        %v844 = vand.u32 %v384, 4294901760
        %845 = vmatmul.mubr.f32.gmra.mxu0 %v844
        %v846 = vpop.f32.mrf.mxu0
        %v847 = vadd.f32 %v773, %v846
        %v848 = vpop.f32.mrf.mxu0
        %v849 = vadd.f32 %v775, %v848
        %850 = vdwg.mxu0
        %851 = vrot.lane.b32.xlu0 %v847, 68
        %v852 = vpop.permute.xlu0 %851
        %853 = vrot.lane.b32.xlu0 %v849, 68
        %v854 = vpop.permute.xlu0 %853
        %vm855 = vcmp.lt.s32.totalorder %v338, 68
        %v856 = vsel %vm855, %v852, %v854
        %v857 = vsel %vm855, %v854, %v852
        %v858 = vsel %vm350, %v857, 0.0
        %v859 = vsel %vm351, %v856, 0.0
        %860 = vrot.lane.b32.xlu0 %v847, 64
        %v861 = vpop.permute.xlu0 %860
        %862 = vrot.lane.b32.xlu0 %v849, 64
        %v863 = vpop.permute.xlu0 %862
        %vm864 = vcmp.lt.s32.totalorder %v338, 64
        %v865 = vsel %vm864, %v861, %v863
        %v866 = vsel %vm864, %v863, %v861
        %v867 = vsel %vm342, %v866, 0.0
        %v868 = vsel %vm343, %v865, 0.0
        %869 = vrot.lane.b32.xlu0 %v847, 60
        %v870 = vpop.permute.xlu0 %869
        %871 = vrot.lane.b32.xlu0 %v849, 60
        %v872 = vpop.permute.xlu0 %871
        %vm873 = vcmp.lt.s32.totalorder %v338, 60
        %v874 = vsel %vm873, %v870, %v872
        %v875 = vsel %vm873, %v872, %v870
        %v876 = vsel %vm352, %v875, 0.0
        %v877 = vsel %vm353, %v874, 0.0
        %878 = vrot.lane.b32.xlu0 %v847, 4
        %v879 = vpop.permute.xlu0 %878
        %880 = vrot.lane.b32.xlu0 %v849, 4
        %v881 = vpop.permute.xlu0 %880
        %vm882 = vcmp.lt.s32.totalorder %v338, 4
        %v883 = vsel %vm882, %v879, %v881
        %v884 = vsel %vm882, %v881, %v879
        %v885 = vsel %vm346, %v884, 0.0
        %v886 = vsel %vm347, %v883, 0.0
        %887 = vrot.lane.b32.xlu0 %v847, 124
        %v888 = vpop.permute.xlu0 %887
        %889 = vrot.lane.b32.xlu0 %v849, 124
        %v890 = vpop.permute.xlu0 %889
        %vm891 = vcmp.lt.s32.totalorder %v338, 124
        %v892 = vsel %vm891, %v888, %v890
        %v893 = vsel %vm891, %v890, %v888
        %v894 = vsel %vm348, %v892, 0.0
        %v895 = vsel %vm349, %v893, 0.0
        %v896 = vsel %vm354, %v856, 0.0
        %v897 = vsel %vm355, %v857, 0.0
        %v898 = vsel %vm344, %v865, 0.0
        %v899 = vsel %vm345, %v866, 0.0
        %v900 = vsel %vm356, %v874, 0.0
        %v901 = vsel %vm357, %v875, 0.0
        %v904 = vrot.slane %v867, 4
        %v905 = vrot.slane %v868, 4
        %v910 = vrot.slane %v885, 4
        %v911 = vrot.slane %v886, 4
        %v916 = vrot.slane %v894, 4
        %v917 = vrot.slane %v895, 4
        %v922 = vrot.slane %v898, 4
        %v923 = vrot.slane %v899, 4
        %vm926 = vcmask 1043456
        %v927 = vsel %vm926, %v858, %v904
        %v928 = vsel %vm926, %v859, %v905
        %v929 = vsel %vm926, %v876, %v910
        %v930 = vsel %vm926, %v877, %v911
        %v931 = vsel %vm926, %v847, %v916
        %v932 = vsel %vm926, %v849, %v917
        %v933 = vsel %vm926, %v896, %v922
        %v934 = vsel %vm926, %v897, %v923
        %v935 = vld [vmem:[%s3] sm:$0xf]
        %v936 = vld [vmem:[%s4] sm:$0xf]
        %938 = vset.pattern.permute.xlu0 0
        %939 = vperm.xlu0 %938, %v936
        %v940 = vpop.permute.xlu0 %939
        %vm942 = vcmask 293888
        %v944 = vsel %vm942, %v935, 0
        %v947 = vsel %vm926, %v900, 0
        %v950 = vsel %vm926, %v901, 0
        %952 = vmatprep.subr.mxu0 0.0
        %953 = vmatpush1.msra.mxu0 0.0
        %954 = vmatprep.subr.mxu0 0.0
        %955 = vmatpush1.msra.mxu0 0.0
        %956 = vmatprep.subr.mxu0 0.0
        %957 = vmatpush1.msra.mxu0 0.0
        %958 = vmatprep.subr.mxu0 0.0
        %959 = vmatpush1.msra.mxu0 0.0
        %960 = vmatprep.subr.mxu0 0.0
        %961 = vmatpush1.msra.mxu0 0.0
        %962 = vmatprep.subr.mxu0 0.0
        %963 = vmatpush1.msra.mxu0 0.0
        %964 = vmatprep.subr.mxu0 0.0
        %965 = vmatpush1.msra.mxu0 0.0
        %966 = vmatprep.subr.mxu0 0.0
        %967 = vmatpush1.msra.mxu0 0.0
        %968 = vmatprep.subr.mxu0 0.0
        %969 = vmatpush1.msra.mxu0 0.0
        %970 = vmatprep.subr.mxu0 0.0
        %971 = vmatpush1.msra.mxu0 0.0
        %972 = vmatprep.subr.mxu0 0.0
        %973 = vmatpush1.msra.mxu0 0.0
        %v974 = vand.u32 %v950, 4294901760
        %975 = vmatprep.subr.mxu0 %v974
        %v976 = vand.u32 %v947, 4294901760
        %977 = vmatpush1.msra.mxu0 %v976
        %v978 = vand.u32 %v934, 4294901760
        %979 = vmatprep.subr.mxu0 %v978
        %v980 = vand.u32 %v933, 4294901760
        %981 = vmatpush1.msra.mxu0 %v980
        %v982 = vand.u32 %v932, 4294901760
        %983 = vmatprep.subr.mxu0 %v982
        %v984 = vand.u32 %v931, 4294901760
        %985 = vmatpush1.msra.mxu0 %v984
        %v986 = vand.u32 %v930, 4294901760
        %987 = vmatprep.subr.mxu0 %v986
        %v988 = vand.u32 %v929, 4294901760
        %989 = vmatpush1.msra.mxu0 %v988
        %v990 = vand.u32 %v928, 4294901760
        %991 = vmatprep.subr.mxu0 %v990
        %v992 = vand.u32 %v927, 4294901760
        %993 = vmatpush1.msra.mxu0 %v992
        %994 = vmatprep.subr.mxu0 0.0
        %995 = vmatpush2.msra.mxu0 0.0
        %996 = vmatprep.subr.mxu0 0.0
        %997 = vmatpush2.msra.mxu0 0.0
        %998 = vmatprep.subr.mxu0 0.0
        %999 = vmatpush2.msra.mxu0 0.0
        %1000 = vmatprep.subr.mxu0 0.0
        %1001 = vmatpush2.msra.mxu0 0.0
        %1002 = vmatprep.subr.mxu0 0.0
        %1003 = vmatpush2.msra.mxu0 0.0
        %1004 = vmatprep.subr.mxu0 0.0
        %1005 = vmatpush2.msra.mxu0 0.0
        %1006 = vmatprep.subr.mxu0 0.0
        %1007 = vmatpush2.msra.mxu0 0.0
        %1008 = vmatprep.subr.mxu0 0.0
        %1009 = vmatpush2.msra.mxu0 0.0
        %1010 = vmatprep.subr.mxu0 0.0
        %1011 = vmatpush2.msra.mxu0 0.0
        %1012 = vmatprep.subr.mxu0 0.0
        %1013 = vmatpush2.msra.mxu0 0.0
        %1014 = vmatprep.subr.mxu0 0.0
        %1015 = vmatpush2.msra.mxu0 0.0
        %1016 = vmatprep.subr.mxu0 0.0
        %1017 = vmatpush2.msra.mxu0 0.0
        %1018 = vmatprep.subr.mxu0 0.0
        %1019 = vmatpush2.msra.mxu0 0.0
        %1020 = vmatprep.subr.mxu0 0.0
        %1021 = vmatpush2.msra.mxu0 0.0
        %1022 = vmatprep.subr.mxu0 0.0
        %1023 = vmatpush2.msra.mxu0 0.0
        %1024 = vmatprep.subr.mxu0 0.0
        %1025 = vmatpush2.msra.mxu0 0.0
        %1026 = vmatprep.mubr.f32.mxu0 0.0
        %v1027 = vand.u32 %v944, 4294901760
        %v1028 = vsub.f32 %v944, %v1027
        %v1029 = vand.u32 %v1028, 4294901760
        %v1030 = vsub.f32 %v1028, %v1029
        %v1031 = vand.u32 %v1030, 4294901760
        %1032 = vmatmul.mubr.f32.gmra.mxu0 %v1031
        %v1033 = vpop.f32.mrf.mxu0
        %v1034 = vadd.f32 %v940, %v1033
        %v1035 = vpop.f32.mrf.mxu0
        %v1036 = vadd.f32 %v940, %v1035
        %1037 = vdwg.mxu0
        %1038 = vmatprep.subr.mxu0 0.0
        %1039 = vmatpush1.msra.mxu0 0.0
        %1040 = vmatprep.subr.mxu0 0.0
        %1041 = vmatpush1.msra.mxu0 0.0
        %1042 = vmatprep.subr.mxu0 0.0
        %1043 = vmatpush1.msra.mxu0 0.0
        %1044 = vmatprep.subr.mxu0 0.0
        %1045 = vmatpush1.msra.mxu0 0.0
        %1046 = vmatprep.subr.mxu0 0.0
        %1047 = vmatpush1.msra.mxu0 0.0
        %1048 = vmatprep.subr.mxu0 0.0
        %1049 = vmatpush1.msra.mxu0 0.0
        %1050 = vmatprep.subr.mxu0 0.0
        %1051 = vmatpush1.msra.mxu0 0.0
        %1052 = vmatprep.subr.mxu0 0.0
        %1053 = vmatpush1.msra.mxu0 0.0
        %1054 = vmatprep.subr.mxu0 0.0
        %1055 = vmatpush1.msra.mxu0 0.0
        %1056 = vmatprep.subr.mxu0 0.0
        %1057 = vmatpush1.msra.mxu0 0.0
        %1058 = vmatprep.subr.mxu0 0.0
        %1059 = vmatpush1.msra.mxu0 0.0
        %v1060 = vand.u32 %v950, 4294901760
        %v1061 = vsub.f32 %v950, %v1060
        %v1062 = vand.u32 %v1061, 4294901760
        %v1063 = vsub.f32 %v1061, %v1062
        %v1064 = vand.u32 %v1063, 4294901760
        %1065 = vmatprep.subr.mxu0 %v1064
        %v1066 = vand.u32 %v947, 4294901760
        %v1067 = vsub.f32 %v947, %v1066
        %v1068 = vand.u32 %v1067, 4294901760
        %v1069 = vsub.f32 %v1067, %v1068
        %v1070 = vand.u32 %v1069, 4294901760
        %1071 = vmatpush1.msra.mxu0 %v1070
        %v1072 = vand.u32 %v934, 4294901760
        %v1073 = vsub.f32 %v934, %v1072
        %v1074 = vand.u32 %v1073, 4294901760
        %v1075 = vsub.f32 %v1073, %v1074
        %v1076 = vand.u32 %v1075, 4294901760
        %1077 = vmatprep.subr.mxu0 %v1076
        %v1078 = vand.u32 %v933, 4294901760
        %v1079 = vsub.f32 %v933, %v1078
        %v1080 = vand.u32 %v1079, 4294901760
        %v1081 = vsub.f32 %v1079, %v1080
        %v1082 = vand.u32 %v1081, 4294901760
        %1083 = vmatpush1.msra.mxu0 %v1082
        %v1084 = vand.u32 %v932, 4294901760
        %v1085 = vsub.f32 %v932, %v1084
        %v1086 = vand.u32 %v1085, 4294901760
        %v1087 = vsub.f32 %v1085, %v1086
        %v1088 = vand.u32 %v1087, 4294901760
        %1089 = vmatprep.subr.mxu0 %v1088
        %v1090 = vand.u32 %v931, 4294901760
        %v1091 = vsub.f32 %v931, %v1090
        %v1092 = vand.u32 %v1091, 4294901760
        %v1093 = vsub.f32 %v1091, %v1092
        %v1094 = vand.u32 %v1093, 4294901760
        %1095 = vmatpush1.msra.mxu0 %v1094
        %v1096 = vand.u32 %v930, 4294901760
        %v1097 = vsub.f32 %v930, %v1096
        %v1098 = vand.u32 %v1097, 4294901760
        %v1099 = vsub.f32 %v1097, %v1098
        %v1100 = vand.u32 %v1099, 4294901760
        %1101 = vmatprep.subr.mxu0 %v1100
        %v1102 = vand.u32 %v929, 4294901760
        %v1103 = vsub.f32 %v929, %v1102
        %v1104 = vand.u32 %v1103, 4294901760
        %v1105 = vsub.f32 %v1103, %v1104
        %v1106 = vand.u32 %v1105, 4294901760
        %1107 = vmatpush1.msra.mxu0 %v1106
        %v1108 = vand.u32 %v928, 4294901760
        %v1109 = vsub.f32 %v928, %v1108
        %v1110 = vand.u32 %v1109, 4294901760
        %v1111 = vsub.f32 %v1109, %v1110
        %v1112 = vand.u32 %v1111, 4294901760
        %1113 = vmatprep.subr.mxu0 %v1112
        %v1114 = vand.u32 %v927, 4294901760
        %v1115 = vsub.f32 %v927, %v1114
        %v1116 = vand.u32 %v1115, 4294901760
        %v1117 = vsub.f32 %v1115, %v1116
        %v1118 = vand.u32 %v1117, 4294901760
        %1119 = vmatpush1.msra.mxu0 %v1118
        %1120 = vmatprep.subr.mxu0 0.0
        %1121 = vmatpush2.msra.mxu0 0.0
        %1122 = vmatprep.subr.mxu0 0.0
        %1123 = vmatpush2.msra.mxu0 0.0
        %1124 = vmatprep.subr.mxu0 0.0
        %1125 = vmatpush2.msra.mxu0 0.0
        %1126 = vmatprep.subr.mxu0 0.0
        %1127 = vmatpush2.msra.mxu0 0.0
        %1128 = vmatprep.subr.mxu0 0.0
        %1129 = vmatpush2.msra.mxu0 0.0
        %1130 = vmatprep.subr.mxu0 0.0
        %1131 = vmatpush2.msra.mxu0 0.0
        %1132 = vmatprep.subr.mxu0 0.0
        %1133 = vmatpush2.msra.mxu0 0.0
        %1134 = vmatprep.subr.mxu0 0.0
        %1135 = vmatpush2.msra.mxu0 0.0
        %1136 = vmatprep.subr.mxu0 0.0
        %1137 = vmatpush2.msra.mxu0 0.0
        %1138 = vmatprep.subr.mxu0 0.0
        %1139 = vmatpush2.msra.mxu0 0.0
        %1140 = vmatprep.subr.mxu0 0.0
        %1141 = vmatpush2.msra.mxu0 0.0
        %1142 = vmatprep.subr.mxu0 0.0
        %1143 = vmatpush2.msra.mxu0 0.0
        %1144 = vmatprep.subr.mxu0 0.0
        %1145 = vmatpush2.msra.mxu0 0.0
        %1146 = vmatprep.subr.mxu0 0.0
        %1147 = vmatpush2.msra.mxu0 0.0
        %1148 = vmatprep.subr.mxu0 0.0
        %1149 = vmatpush2.msra.mxu0 0.0
        %1150 = vmatprep.subr.mxu0 0.0
        %1151 = vmatpush2.msra.mxu0 0.0
        %1152 = vmatprep.mubr.f32.mxu0 0.0
        %v1153 = vand.u32 %v944, 4294901760
        %1154 = vmatmul.mubr.f32.gmra.mxu0 %v1153
        %v1155 = vpop.f32.mrf.mxu0
        %v1156 = vadd.f32 %v1034, %v1155
        %v1157 = vpop.f32.mrf.mxu0
        %v1158 = vadd.f32 %v1036, %v1157
        %1159 = vdwg.mxu0
        %1160 = vmatprep.subr.mxu0 0.0
        %1161 = vmatpush1.msra.mxu0 0.0
        %1162 = vmatprep.subr.mxu0 0.0
        %1163 = vmatpush1.msra.mxu0 0.0
        %1164 = vmatprep.subr.mxu0 0.0
        %1165 = vmatpush1.msra.mxu0 0.0
        %1166 = vmatprep.subr.mxu0 0.0
        %1167 = vmatpush1.msra.mxu0 0.0
        %1168 = vmatprep.subr.mxu0 0.0
        %1169 = vmatpush1.msra.mxu0 0.0
        %1170 = vmatprep.subr.mxu0 0.0
        %1171 = vmatpush1.msra.mxu0 0.0
        %1172 = vmatprep.subr.mxu0 0.0
        %1173 = vmatpush1.msra.mxu0 0.0
        %1174 = vmatprep.subr.mxu0 0.0
        %1175 = vmatpush1.msra.mxu0 0.0
        %1176 = vmatprep.subr.mxu0 0.0
        %1177 = vmatpush1.msra.mxu0 0.0
        %1178 = vmatprep.subr.mxu0 0.0
        %1179 = vmatpush1.msra.mxu0 0.0
        %1180 = vmatprep.subr.mxu0 0.0
        %1181 = vmatpush1.msra.mxu0 0.0
        %v1182 = vand.u32 %v950, 4294901760
        %v1183 = vsub.f32 %v950, %v1182
        %1184 = vmatprep.subr.mxu0 %v1183
        %v1185 = vand.u32 %v947, 4294901760
        %v1186 = vsub.f32 %v947, %v1185
        %1187 = vmatpush1.msra.mxu0 %v1186
        %v1188 = vand.u32 %v934, 4294901760
        %v1189 = vsub.f32 %v934, %v1188
        %1190 = vmatprep.subr.mxu0 %v1189
        %v1191 = vand.u32 %v933, 4294901760
        %v1192 = vsub.f32 %v933, %v1191
        %1193 = vmatpush1.msra.mxu0 %v1192
        %v1194 = vand.u32 %v932, 4294901760
        %v1195 = vsub.f32 %v932, %v1194
        %1196 = vmatprep.subr.mxu0 %v1195
        %v1197 = vand.u32 %v931, 4294901760
        %v1198 = vsub.f32 %v931, %v1197
        %1199 = vmatpush1.msra.mxu0 %v1198
        %v1200 = vand.u32 %v930, 4294901760
        %v1201 = vsub.f32 %v930, %v1200
        %1202 = vmatprep.subr.mxu0 %v1201
        %v1203 = vand.u32 %v929, 4294901760
        %v1204 = vsub.f32 %v929, %v1203
        %1205 = vmatpush1.msra.mxu0 %v1204
        %v1206 = vand.u32 %v928, 4294901760
        %v1207 = vsub.f32 %v928, %v1206
        %1208 = vmatprep.subr.mxu0 %v1207
        %v1209 = vand.u32 %v927, 4294901760
        %v1210 = vsub.f32 %v927, %v1209
        %1211 = vmatpush1.msra.mxu0 %v1210
        %1212 = vmatprep.subr.mxu0 0.0
        %1213 = vmatpush2.msra.mxu0 0.0
        %1214 = vmatprep.subr.mxu0 0.0
        %1215 = vmatpush2.msra.mxu0 0.0
        %1216 = vmatprep.subr.mxu0 0.0
        %1217 = vmatpush2.msra.mxu0 0.0
        %1218 = vmatprep.subr.mxu0 0.0
        %1219 = vmatpush2.msra.mxu0 0.0
        %1220 = vmatprep.subr.mxu0 0.0
        %1221 = vmatpush2.msra.mxu0 0.0
        %1222 = vmatprep.subr.mxu0 0.0
        %1223 = vmatpush2.msra.mxu0 0.0
        %1224 = vmatprep.subr.mxu0 0.0
        %1225 = vmatpush2.msra.mxu0 0.0
        %1226 = vmatprep.subr.mxu0 0.0
        %1227 = vmatpush2.msra.mxu0 0.0
        %1228 = vmatprep.subr.mxu0 0.0
        %1229 = vmatpush2.msra.mxu0 0.0
        %1230 = vmatprep.subr.mxu0 0.0
        %1231 = vmatpush2.msra.mxu0 0.0
        %1232 = vmatprep.subr.mxu0 0.0
        %1233 = vmatpush2.msra.mxu0 0.0
        %1234 = vmatprep.subr.mxu0 0.0
        %1235 = vmatpush2.msra.mxu0 0.0
        %1236 = vmatprep.subr.mxu0 0.0
        %1237 = vmatpush2.msra.mxu0 0.0
        %1238 = vmatprep.subr.mxu0 0.0
        %1239 = vmatpush2.msra.mxu0 0.0
        %1240 = vmatprep.subr.mxu0 0.0
        %1241 = vmatpush2.msra.mxu0 0.0
        %1242 = vmatprep.subr.mxu0 0.0
        %1243 = vmatpush2.msra.mxu0 0.0
        %1244 = vmatprep.mubr.f32.mxu0 0.0
        %v1245 = vand.u32 %v944, 4294901760
        %v1246 = vsub.f32 %v944, %v1245
        %1247 = vmatmul.mubr.f32.gmra.mxu0 %v1246
        %v1248 = vpop.f32.mrf.mxu0
        %v1249 = vadd.f32 %v1156, %v1248
        %v1250 = vpop.f32.mrf.mxu0
        %v1251 = vadd.f32 %v1158, %v1250
        %1252 = vdwg.mxu0
        %1253 = vmatprep.subr.mxu0 0.0
        %1254 = vmatpush1.msra.mxu0 0.0
        %1255 = vmatprep.subr.mxu0 0.0
        %1256 = vmatpush1.msra.mxu0 0.0
        %1257 = vmatprep.subr.mxu0 0.0
        %1258 = vmatpush1.msra.mxu0 0.0
        %1259 = vmatprep.subr.mxu0 0.0
        %1260 = vmatpush1.msra.mxu0 0.0
        %1261 = vmatprep.subr.mxu0 0.0
        %1262 = vmatpush1.msra.mxu0 0.0
        %1263 = vmatprep.subr.mxu0 0.0
        %1264 = vmatpush1.msra.mxu0 0.0
        %1265 = vmatprep.subr.mxu0 0.0
        %1266 = vmatpush1.msra.mxu0 0.0
        %1267 = vmatprep.subr.mxu0 0.0
        %1268 = vmatpush1.msra.mxu0 0.0
        %1269 = vmatprep.subr.mxu0 0.0
        %1270 = vmatpush1.msra.mxu0 0.0
        %1271 = vmatprep.subr.mxu0 0.0
        %1272 = vmatpush1.msra.mxu0 0.0
        %1273 = vmatprep.subr.mxu0 0.0
        %1274 = vmatpush1.msra.mxu0 0.0
        %v1275 = vand.u32 %v950, 4294901760
        %1276 = vmatprep.subr.mxu0 %v1275
        %v1277 = vand.u32 %v947, 4294901760
        %1278 = vmatpush1.msra.mxu0 %v1277
        %v1279 = vand.u32 %v934, 4294901760
        %1280 = vmatprep.subr.mxu0 %v1279
        %v1281 = vand.u32 %v933, 4294901760
        %1282 = vmatpush1.msra.mxu0 %v1281
        %v1283 = vand.u32 %v932, 4294901760
        %1284 = vmatprep.subr.mxu0 %v1283
        %v1285 = vand.u32 %v931, 4294901760
        %1286 = vmatpush1.msra.mxu0 %v1285
        %v1287 = vand.u32 %v930, 4294901760
        %1288 = vmatprep.subr.mxu0 %v1287
        %v1289 = vand.u32 %v929, 4294901760
        %1290 = vmatpush1.msra.mxu0 %v1289
        %v1291 = vand.u32 %v928, 4294901760
        %1292 = vmatprep.subr.mxu0 %v1291
        %v1293 = vand.u32 %v927, 4294901760
        %1294 = vmatpush1.msra.mxu0 %v1293
        %1295 = vmatprep.subr.mxu0 0.0
        %1296 = vmatpush2.msra.mxu0 0.0
        %1297 = vmatprep.subr.mxu0 0.0
        %1298 = vmatpush2.msra.mxu0 0.0
        %1299 = vmatprep.subr.mxu0 0.0
        %1300 = vmatpush2.msra.mxu0 0.0
        %1301 = vmatprep.subr.mxu0 0.0
        %1302 = vmatpush2.msra.mxu0 0.0
        %1303 = vmatprep.subr.mxu0 0.0
        %1304 = vmatpush2.msra.mxu0 0.0
        %1305 = vmatprep.subr.mxu0 0.0
        %1306 = vmatpush2.msra.mxu0 0.0
        %1307 = vmatprep.subr.mxu0 0.0
        %1308 = vmatpush2.msra.mxu0 0.0
        %1309 = vmatprep.subr.mxu0 0.0
        %1310 = vmatpush2.msra.mxu0 0.0
        %1311 = vmatprep.subr.mxu0 0.0
        %1312 = vmatpush2.msra.mxu0 0.0
        %1313 = vmatprep.subr.mxu0 0.0
        %1314 = vmatpush2.msra.mxu0 0.0
        %1315 = vmatprep.subr.mxu0 0.0
        %1316 = vmatpush2.msra.mxu0 0.0
        %1317 = vmatprep.subr.mxu0 0.0
        %1318 = vmatpush2.msra.mxu0 0.0
        %1319 = vmatprep.subr.mxu0 0.0
        %1320 = vmatpush2.msra.mxu0 0.0
        %1321 = vmatprep.subr.mxu0 0.0
        %1322 = vmatpush2.msra.mxu0 0.0
        %1323 = vmatprep.subr.mxu0 0.0
        %1324 = vmatpush2.msra.mxu0 0.0
        %1325 = vmatprep.subr.mxu0 0.0
        %1326 = vmatpush2.msra.mxu0 0.0
        %1327 = vmatprep.mubr.f32.mxu0 0.0
        %v1328 = vand.u32 %v944, 4294901760
        %v1329 = vsub.f32 %v944, %v1328
        %v1330 = vand.u32 %v1329, 4294901760
        %1331 = vmatmul.mubr.f32.gmra.mxu0 %v1330
        %v1332 = vpop.f32.mrf.mxu0
        %v1333 = vadd.f32 %v1249, %v1332
        %v1334 = vpop.f32.mrf.mxu0
        %v1335 = vadd.f32 %v1251, %v1334
        %1336 = vdwg.mxu0
        %1337 = vmatprep.subr.mxu0 0.0
        %1338 = vmatpush1.msra.mxu0 0.0
        %1339 = vmatprep.subr.mxu0 0.0
        %1340 = vmatpush1.msra.mxu0 0.0
        %1341 = vmatprep.subr.mxu0 0.0
        %1342 = vmatpush1.msra.mxu0 0.0
        %1343 = vmatprep.subr.mxu0 0.0
        %1344 = vmatpush1.msra.mxu0 0.0
        %1345 = vmatprep.subr.mxu0 0.0
        %1346 = vmatpush1.msra.mxu0 0.0
        %1347 = vmatprep.subr.mxu0 0.0
        %1348 = vmatpush1.msra.mxu0 0.0
        %1349 = vmatprep.subr.mxu0 0.0
        %1350 = vmatpush1.msra.mxu0 0.0
        %1351 = vmatprep.subr.mxu0 0.0
        %1352 = vmatpush1.msra.mxu0 0.0
        %1353 = vmatprep.subr.mxu0 0.0
        %1354 = vmatpush1.msra.mxu0 0.0
        %1355 = vmatprep.subr.mxu0 0.0
        %1356 = vmatpush1.msra.mxu0 0.0
        %1357 = vmatprep.subr.mxu0 0.0
        %1358 = vmatpush1.msra.mxu0 0.0
        %v1359 = vand.u32 %v950, 4294901760
        %v1360 = vsub.f32 %v950, %v1359
        %v1361 = vand.u32 %v1360, 4294901760
        %1362 = vmatprep.subr.mxu0 %v1361
        %v1363 = vand.u32 %v947, 4294901760
        %v1364 = vsub.f32 %v947, %v1363
        %v1365 = vand.u32 %v1364, 4294901760
        %1366 = vmatpush1.msra.mxu0 %v1365
        %v1367 = vand.u32 %v934, 4294901760
        %v1368 = vsub.f32 %v934, %v1367
        %v1369 = vand.u32 %v1368, 4294901760
        %1370 = vmatprep.subr.mxu0 %v1369
        %v1371 = vand.u32 %v933, 4294901760
        %v1372 = vsub.f32 %v933, %v1371
        %v1373 = vand.u32 %v1372, 4294901760
        %1374 = vmatpush1.msra.mxu0 %v1373
        %v1375 = vand.u32 %v932, 4294901760
        %v1376 = vsub.f32 %v932, %v1375
        %v1377 = vand.u32 %v1376, 4294901760
        %1378 = vmatprep.subr.mxu0 %v1377
        %v1379 = vand.u32 %v931, 4294901760
        %v1380 = vsub.f32 %v931, %v1379
        %v1381 = vand.u32 %v1380, 4294901760
        %1382 = vmatpush1.msra.mxu0 %v1381
        %v1383 = vand.u32 %v930, 4294901760
        %v1384 = vsub.f32 %v930, %v1383
        %v1385 = vand.u32 %v1384, 4294901760
        %1386 = vmatprep.subr.mxu0 %v1385
        %v1387 = vand.u32 %v929, 4294901760
        %v1388 = vsub.f32 %v929, %v1387
        %v1389 = vand.u32 %v1388, 4294901760
        %1390 = vmatpush1.msra.mxu0 %v1389
        %v1391 = vand.u32 %v928, 4294901760
        %v1392 = vsub.f32 %v928, %v1391
        %v1393 = vand.u32 %v1392, 4294901760
        %1394 = vmatprep.subr.mxu0 %v1393
        %v1395 = vand.u32 %v927, 4294901760
        %v1396 = vsub.f32 %v927, %v1395
        %v1397 = vand.u32 %v1396, 4294901760
        %1398 = vmatpush1.msra.mxu0 %v1397
        %1399 = vmatprep.subr.mxu0 0.0
        %1400 = vmatpush2.msra.mxu0 0.0
        %1401 = vmatprep.subr.mxu0 0.0
        %1402 = vmatpush2.msra.mxu0 0.0
        %1403 = vmatprep.subr.mxu0 0.0
        %1404 = vmatpush2.msra.mxu0 0.0
        %1405 = vmatprep.subr.mxu0 0.0
        %1406 = vmatpush2.msra.mxu0 0.0
        %1407 = vmatprep.subr.mxu0 0.0
        %1408 = vmatpush2.msra.mxu0 0.0
        %1409 = vmatprep.subr.mxu0 0.0
        %1410 = vmatpush2.msra.mxu0 0.0
        %1411 = vmatprep.subr.mxu0 0.0
        %1412 = vmatpush2.msra.mxu0 0.0
        %1413 = vmatprep.subr.mxu0 0.0
        %1414 = vmatpush2.msra.mxu0 0.0
        %1415 = vmatprep.subr.mxu0 0.0
        %1416 = vmatpush2.msra.mxu0 0.0
        %1417 = vmatprep.subr.mxu0 0.0
        %1418 = vmatpush2.msra.mxu0 0.0
        %1419 = vmatprep.subr.mxu0 0.0
        %1420 = vmatpush2.msra.mxu0 0.0
        %1421 = vmatprep.subr.mxu0 0.0
        %1422 = vmatpush2.msra.mxu0 0.0
        %1423 = vmatprep.subr.mxu0 0.0
        %1424 = vmatpush2.msra.mxu0 0.0
        %1425 = vmatprep.subr.mxu0 0.0
        %1426 = vmatpush2.msra.mxu0 0.0
        %1427 = vmatprep.subr.mxu0 0.0
        %1428 = vmatpush2.msra.mxu0 0.0
        %1429 = vmatprep.subr.mxu0 0.0
        %1430 = vmatpush2.msra.mxu0 0.0
        %1431 = vmatprep.mubr.f32.mxu0 0.0
        %v1432 = vand.u32 %v944, 4294901760
        %1433 = vmatmul.mubr.f32.gmra.mxu0 %v1432
        %v1434 = vpop.f32.mrf.mxu0
        %v1435 = vadd.f32 %v1333, %v1434
        %v1436 = vpop.f32.mrf.mxu0
        %v1437 = vadd.f32 %v1335, %v1436
        %1438 = vdwg.mxu0
        %1439 = vmatprep.subr.mxu0 0.0
        %1440 = vmatpush1.msra.mxu0 0.0
        %1441 = vmatprep.subr.mxu0 0.0
        %1442 = vmatpush1.msra.mxu0 0.0
        %1443 = vmatprep.subr.mxu0 0.0
        %1444 = vmatpush1.msra.mxu0 0.0
        %1445 = vmatprep.subr.mxu0 0.0
        %1446 = vmatpush1.msra.mxu0 0.0
        %1447 = vmatprep.subr.mxu0 0.0
        %1448 = vmatpush1.msra.mxu0 0.0
        %1449 = vmatprep.subr.mxu0 0.0
        %1450 = vmatpush1.msra.mxu0 0.0
        %1451 = vmatprep.subr.mxu0 0.0
        %1452 = vmatpush1.msra.mxu0 0.0
        %1453 = vmatprep.subr.mxu0 0.0
        %1454 = vmatpush1.msra.mxu0 0.0
        %1455 = vmatprep.subr.mxu0 0.0
        %1456 = vmatpush1.msra.mxu0 0.0
        %1457 = vmatprep.subr.mxu0 0.0
        %1458 = vmatpush1.msra.mxu0 0.0
        %1459 = vmatprep.subr.mxu0 0.0
        %1460 = vmatpush1.msra.mxu0 0.0
        %v1461 = vand.u32 %v950, 4294901760
        %1462 = vmatprep.subr.mxu0 %v1461
        %v1463 = vand.u32 %v947, 4294901760
        %1464 = vmatpush1.msra.mxu0 %v1463
        %v1465 = vand.u32 %v934, 4294901760
        %1466 = vmatprep.subr.mxu0 %v1465
        %v1467 = vand.u32 %v933, 4294901760
        %1468 = vmatpush1.msra.mxu0 %v1467
        %v1469 = vand.u32 %v932, 4294901760
        %1470 = vmatprep.subr.mxu0 %v1469
        %v1471 = vand.u32 %v931, 4294901760
        %1472 = vmatpush1.msra.mxu0 %v1471
        %v1473 = vand.u32 %v930, 4294901760
        %1474 = vmatprep.subr.mxu0 %v1473
        %v1475 = vand.u32 %v929, 4294901760
        %1476 = vmatpush1.msra.mxu0 %v1475
        %v1477 = vand.u32 %v928, 4294901760
        %1478 = vmatprep.subr.mxu0 %v1477
        %v1479 = vand.u32 %v927, 4294901760
        %1480 = vmatpush1.msra.mxu0 %v1479
        %1481 = vmatprep.subr.mxu0 0.0
        %1482 = vmatpush2.msra.mxu0 0.0
        %1483 = vmatprep.subr.mxu0 0.0
        %1484 = vmatpush2.msra.mxu0 0.0
        %1485 = vmatprep.subr.mxu0 0.0
        %1486 = vmatpush2.msra.mxu0 0.0
        %1487 = vmatprep.subr.mxu0 0.0
        %1488 = vmatpush2.msra.mxu0 0.0
        %1489 = vmatprep.subr.mxu0 0.0
        %1490 = vmatpush2.msra.mxu0 0.0
        %1491 = vmatprep.subr.mxu0 0.0
        %1492 = vmatpush2.msra.mxu0 0.0
        %1493 = vmatprep.subr.mxu0 0.0
        %1494 = vmatpush2.msra.mxu0 0.0
        %1495 = vmatprep.subr.mxu0 0.0
        %1496 = vmatpush2.msra.mxu0 0.0
        %1497 = vmatprep.subr.mxu0 0.0
        %1498 = vmatpush2.msra.mxu0 0.0
        %1499 = vmatprep.subr.mxu0 0.0
        %1500 = vmatpush2.msra.mxu0 0.0
        %1501 = vmatprep.subr.mxu0 0.0
        %1502 = vmatpush2.msra.mxu0 0.0
        %1503 = vmatprep.subr.mxu0 0.0
        %1504 = vmatpush2.msra.mxu0 0.0
        %1505 = vmatprep.subr.mxu0 0.0
        %1506 = vmatpush2.msra.mxu0 0.0
        %1507 = vmatprep.subr.mxu0 0.0
        %1508 = vmatpush2.msra.mxu0 0.0
        %1509 = vmatprep.subr.mxu0 0.0
        %1510 = vmatpush2.msra.mxu0 0.0
        %1511 = vmatprep.subr.mxu0 0.0
        %1512 = vmatpush2.msra.mxu0 0.0
        %1513 = vmatprep.mubr.f32.mxu0 0.0
        %v1514 = vand.u32 %v944, 4294901760
        %1515 = vmatmul.mubr.f32.gmra.mxu0 %v1514
        %v1516 = vpop.f32.mrf.mxu0
        %v1517 = vadd.f32 %v1435, %v1516
        %v1518 = vpop.f32.mrf.mxu0
        %v1519 = vadd.f32 %v1437, %v1518
        %1520 = vdwg.mxu0
        %1521 = vrot.lane.b32.xlu0 %v1517, 68
        %v1522 = vpop.permute.xlu0 %1521
        %1523 = vrot.lane.b32.xlu0 %v1519, 68
        %v1524 = vpop.permute.xlu0 %1523
        %v1525 = vsel %vm855, %v1522, %v1524
        %v1526 = vsel %vm855, %v1524, %v1522
        %v1527 = vsel %vm350, %v1526, 0.0
        %v1528 = vsel %vm351, %v1525, 0.0
        %1529 = vrot.lane.b32.xlu0 %v1517, 64
        %v1530 = vpop.permute.xlu0 %1529
        %1531 = vrot.lane.b32.xlu0 %v1519, 64
        %v1532 = vpop.permute.xlu0 %1531
        %v1533 = vsel %vm864, %v1530, %v1532
        %v1534 = vsel %vm864, %v1532, %v1530
        %v1535 = vsel %vm342, %v1534, 0.0
        %v1536 = vsel %vm343, %v1533, 0.0
        %1537 = vrot.lane.b32.xlu0 %v1517, 60
        %v1538 = vpop.permute.xlu0 %1537
        %1539 = vrot.lane.b32.xlu0 %v1519, 60
        %v1540 = vpop.permute.xlu0 %1539
        %v1541 = vsel %vm873, %v1538, %v1540
        %v1542 = vsel %vm873, %v1540, %v1538
        %v1543 = vsel %vm352, %v1542, 0.0
        %v1544 = vsel %vm353, %v1541, 0.0
        %1545 = vrot.lane.b32.xlu0 %v1517, 4
        %v1546 = vpop.permute.xlu0 %1545
        %1547 = vrot.lane.b32.xlu0 %v1519, 4
        %v1548 = vpop.permute.xlu0 %1547
        %v1549 = vsel %vm882, %v1546, %v1548
        %v1550 = vsel %vm882, %v1548, %v1546
        %v1551 = vsel %vm346, %v1550, 0.0
        %v1552 = vsel %vm347, %v1549, 0.0
        %1553 = vrot.lane.b32.xlu0 %v1517, 124
        %v1554 = vpop.permute.xlu0 %1553
        %1555 = vrot.lane.b32.xlu0 %v1519, 124
        %v1556 = vpop.permute.xlu0 %1555
        %v1557 = vsel %vm891, %v1554, %v1556
        %v1558 = vsel %vm891, %v1556, %v1554
        %v1559 = vsel %vm348, %v1557, 0.0
        %v1560 = vsel %vm349, %v1558, 0.0
        %v1561 = vsel %vm354, %v1525, 0.0
        %v1562 = vsel %vm355, %v1526, 0.0
        %v1563 = vsel %vm344, %v1533, 0.0
        %v1564 = vsel %vm345, %v1534, 0.0
        %v1565 = vsel %vm356, %v1541, 0.0
        %v1566 = vsel %vm357, %v1542, 0.0
        %v1569 = vrot.slane %v1535, 4
        %v1570 = vrot.slane %v1536, 4
        %v1575 = vrot.slane %v1551, 4
        %v1576 = vrot.slane %v1552, 4
        %v1581 = vrot.slane %v1559, 4
        %v1582 = vrot.slane %v1560, 4
        %v1587 = vrot.slane %v1563, 4
        %v1588 = vrot.slane %v1564, 4
        %v1591 = vsel %vm926, %v1527, %v1569
        %v1592 = vsel %vm926, %v1528, %v1570
        %v1593 = vsel %vm926, %v1543, %v1575
        %v1594 = vsel %vm926, %v1544, %v1576
        %v1595 = vsel %vm926, %v1517, %v1581
        %v1596 = vsel %vm926, %v1519, %v1582
        %v1597 = vsel %vm926, %v1561, %v1587
        %v1598 = vsel %vm926, %v1562, %v1588
        %v1599 = vld [vmem:[%s5] sm:$0x1]
        %v1600 = vld [vmem:[#allocation2] sm:$0x1]
        %1602 = vset.pattern.permute.xlu0 0
        %1603 = vperm.xlu0 %1602, %v1600
        %v1604 = vpop.permute.xlu0 %1603
        %v1606 = vlaneseq
        %v1607 = vshrl.u32 %v1606, 7
        %v1608 = vsub.s32 0, %v1607
        %v1609 = vrot.slane %v1604, %v1608
        %v1611 = vsel %vm942, %v1599, 0
        %v1614 = vsel %vm926, %v1565, 0
        %v1617 = vsel %vm926, %v1566, 0
        %1619 = vmatprep.subr.mxu0 0.0
        %1620 = vmatpush1.msra.mxu0 0.0
        %1621 = vmatprep.subr.mxu0 0.0
        %1622 = vmatpush1.msra.mxu0 0.0
        %1623 = vmatprep.subr.mxu0 0.0
        %1624 = vmatpush1.msra.mxu0 0.0
        %1625 = vmatprep.subr.mxu0 0.0
        %1626 = vmatpush1.msra.mxu0 0.0
        %1627 = vmatprep.subr.mxu0 0.0
        %1628 = vmatpush1.msra.mxu0 0.0
        %1629 = vmatprep.subr.mxu0 0.0
        %1630 = vmatpush1.msra.mxu0 0.0
        %1631 = vmatprep.subr.mxu0 0.0
        %1632 = vmatpush1.msra.mxu0 0.0
        %1633 = vmatprep.subr.mxu0 0.0
        %1634 = vmatpush1.msra.mxu0 0.0
        %1635 = vmatprep.subr.mxu0 0.0
        %1636 = vmatpush1.msra.mxu0 0.0
        %1637 = vmatprep.subr.mxu0 0.0
        %1638 = vmatpush1.msra.mxu0 0.0
        %1639 = vmatprep.subr.mxu0 0.0
        %1640 = vmatpush1.msra.mxu0 0.0
        %v1641 = vand.u32 %v1617, 4294901760
        %1642 = vmatprep.subr.mxu0 %v1641
        %v1643 = vand.u32 %v1614, 4294901760
        %1644 = vmatpush1.msra.mxu0 %v1643
        %v1645 = vand.u32 %v1598, 4294901760
        %1646 = vmatprep.subr.mxu0 %v1645
        %v1647 = vand.u32 %v1597, 4294901760
        %1648 = vmatpush1.msra.mxu0 %v1647
        %v1649 = vand.u32 %v1596, 4294901760
        %1650 = vmatprep.subr.mxu0 %v1649
        %v1651 = vand.u32 %v1595, 4294901760
        %1652 = vmatpush1.msra.mxu0 %v1651
        %v1653 = vand.u32 %v1594, 4294901760
        %1654 = vmatprep.subr.mxu0 %v1653
        %v1655 = vand.u32 %v1593, 4294901760
        %1656 = vmatpush1.msra.mxu0 %v1655
        %v1657 = vand.u32 %v1592, 4294901760
        %1658 = vmatprep.subr.mxu0 %v1657
        %v1659 = vand.u32 %v1591, 4294901760
        %1660 = vmatpush1.msra.mxu0 %v1659
        %1661 = vmatprep.subr.mxu0 0.0
        %1662 = vmatpush2.msra.mxu0 0.0
        %1663 = vmatprep.subr.mxu0 0.0
        %1664 = vmatpush2.msra.mxu0 0.0
        %1665 = vmatprep.subr.mxu0 0.0
        %1666 = vmatpush2.msra.mxu0 0.0
        %1667 = vmatprep.subr.mxu0 0.0
        %1668 = vmatpush2.msra.mxu0 0.0
        %1669 = vmatprep.subr.mxu0 0.0
        %1670 = vmatpush2.msra.mxu0 0.0
        %1671 = vmatprep.subr.mxu0 0.0
        %1672 = vmatpush2.msra.mxu0 0.0
        %1673 = vmatprep.subr.mxu0 0.0
        %1674 = vmatpush2.msra.mxu0 0.0
        %1675 = vmatprep.subr.mxu0 0.0
        %1676 = vmatpush2.msra.mxu0 0.0
        %1677 = vmatprep.subr.mxu0 0.0
        %1678 = vmatpush2.msra.mxu0 0.0
        %1679 = vmatprep.subr.mxu0 0.0
        %1680 = vmatpush2.msra.mxu0 0.0
        %1681 = vmatprep.subr.mxu0 0.0
        %1682 = vmatpush2.msra.mxu0 0.0
        %1683 = vmatprep.subr.mxu0 0.0
        %1684 = vmatpush2.msra.mxu0 0.0
        %1685 = vmatprep.subr.mxu0 0.0
        %1686 = vmatpush2.msra.mxu0 0.0
        %1687 = vmatprep.subr.mxu0 0.0
        %1688 = vmatpush2.msra.mxu0 0.0
        %1689 = vmatprep.subr.mxu0 0.0
        %1690 = vmatpush2.msra.mxu0 0.0
        %1691 = vmatprep.subr.mxu0 0.0
        %1692 = vmatpush2.msra.mxu0 0.0
        %1693 = vmatprep.mubr.f32.mxu0 0.0
        %v1694 = vand.u32 %v1611, 4294901760
        %v1695 = vsub.f32 %v1611, %v1694
        %v1696 = vand.u32 %v1695, 4294901760
        %v1697 = vsub.f32 %v1695, %v1696
        %v1698 = vand.u32 %v1697, 4294901760
        %1699 = vmatmul.mubr.f32.gmra.mxu0 %v1698
        %v1700 = vpop.f32.mrf.mxu0
        %v1701 = vadd.f32 %v1609, %v1700
        %v1702 = vpop.f32.mrf.mxu0
        %v1703 = vadd.f32 %v1609, %v1702
        %1704 = vdwg.mxu0
        %1705 = vmatprep.subr.mxu0 0.0
        %1706 = vmatpush1.msra.mxu0 0.0
        %1707 = vmatprep.subr.mxu0 0.0
        %1708 = vmatpush1.msra.mxu0 0.0
        %1709 = vmatprep.subr.mxu0 0.0
        %1710 = vmatpush1.msra.mxu0 0.0
        %1711 = vmatprep.subr.mxu0 0.0
        %1712 = vmatpush1.msra.mxu0 0.0
        %1713 = vmatprep.subr.mxu0 0.0
        %1714 = vmatpush1.msra.mxu0 0.0
        %1715 = vmatprep.subr.mxu0 0.0
        %1716 = vmatpush1.msra.mxu0 0.0
        %1717 = vmatprep.subr.mxu0 0.0
        %1718 = vmatpush1.msra.mxu0 0.0
        %1719 = vmatprep.subr.mxu0 0.0
        %1720 = vmatpush1.msra.mxu0 0.0
        %1721 = vmatprep.subr.mxu0 0.0
        %1722 = vmatpush1.msra.mxu0 0.0
        %1723 = vmatprep.subr.mxu0 0.0
        %1724 = vmatpush1.msra.mxu0 0.0
        %1725 = vmatprep.subr.mxu0 0.0
        %1726 = vmatpush1.msra.mxu0 0.0
        %v1727 = vand.u32 %v1617, 4294901760
        %v1728 = vsub.f32 %v1617, %v1727
        %v1729 = vand.u32 %v1728, 4294901760
        %v1730 = vsub.f32 %v1728, %v1729
        %v1731 = vand.u32 %v1730, 4294901760
        %1732 = vmatprep.subr.mxu0 %v1731
        %v1733 = vand.u32 %v1614, 4294901760
        %v1734 = vsub.f32 %v1614, %v1733
        %v1735 = vand.u32 %v1734, 4294901760
        %v1736 = vsub.f32 %v1734, %v1735
        %v1737 = vand.u32 %v1736, 4294901760
        %1738 = vmatpush1.msra.mxu0 %v1737
        %v1739 = vand.u32 %v1598, 4294901760
        %v1740 = vsub.f32 %v1598, %v1739
        %v1741 = vand.u32 %v1740, 4294901760
        %v1742 = vsub.f32 %v1740, %v1741
        %v1743 = vand.u32 %v1742, 4294901760
        %1744 = vmatprep.subr.mxu0 %v1743
        %v1745 = vand.u32 %v1597, 4294901760
        %v1746 = vsub.f32 %v1597, %v1745
        %v1747 = vand.u32 %v1746, 4294901760
        %v1748 = vsub.f32 %v1746, %v1747
        %v1749 = vand.u32 %v1748, 4294901760
        %1750 = vmatpush1.msra.mxu0 %v1749
        %v1751 = vand.u32 %v1596, 4294901760
        %v1752 = vsub.f32 %v1596, %v1751
        %v1753 = vand.u32 %v1752, 4294901760
        %v1754 = vsub.f32 %v1752, %v1753
        %v1755 = vand.u32 %v1754, 4294901760
        %1756 = vmatprep.subr.mxu0 %v1755
        %v1757 = vand.u32 %v1595, 4294901760
        %v1758 = vsub.f32 %v1595, %v1757
        %v1759 = vand.u32 %v1758, 4294901760
        %v1760 = vsub.f32 %v1758, %v1759
        %v1761 = vand.u32 %v1760, 4294901760
        %1762 = vmatpush1.msra.mxu0 %v1761
        %v1763 = vand.u32 %v1594, 4294901760
        %v1764 = vsub.f32 %v1594, %v1763
        %v1765 = vand.u32 %v1764, 4294901760
        %v1766 = vsub.f32 %v1764, %v1765
        %v1767 = vand.u32 %v1766, 4294901760
        %1768 = vmatprep.subr.mxu0 %v1767
        %v1769 = vand.u32 %v1593, 4294901760
        %v1770 = vsub.f32 %v1593, %v1769
        %v1771 = vand.u32 %v1770, 4294901760
        %v1772 = vsub.f32 %v1770, %v1771
        %v1773 = vand.u32 %v1772, 4294901760
        %1774 = vmatpush1.msra.mxu0 %v1773
        %v1775 = vand.u32 %v1592, 4294901760
        %v1776 = vsub.f32 %v1592, %v1775
        %v1777 = vand.u32 %v1776, 4294901760
        %v1778 = vsub.f32 %v1776, %v1777
        %v1779 = vand.u32 %v1778, 4294901760
        %1780 = vmatprep.subr.mxu0 %v1779
        %v1781 = vand.u32 %v1591, 4294901760
        %v1782 = vsub.f32 %v1591, %v1781
        %v1783 = vand.u32 %v1782, 4294901760
        %v1784 = vsub.f32 %v1782, %v1783
        %v1785 = vand.u32 %v1784, 4294901760
        %1786 = vmatpush1.msra.mxu0 %v1785
        %1787 = vmatprep.subr.mxu0 0.0
        %1788 = vmatpush2.msra.mxu0 0.0
        %1789 = vmatprep.subr.mxu0 0.0
        %1790 = vmatpush2.msra.mxu0 0.0
        %1791 = vmatprep.subr.mxu0 0.0
        %1792 = vmatpush2.msra.mxu0 0.0
        %1793 = vmatprep.subr.mxu0 0.0
        %1794 = vmatpush2.msra.mxu0 0.0
        %1795 = vmatprep.subr.mxu0 0.0
        %1796 = vmatpush2.msra.mxu0 0.0
        %1797 = vmatprep.subr.mxu0 0.0
        %1798 = vmatpush2.msra.mxu0 0.0
        %1799 = vmatprep.subr.mxu0 0.0
        %1800 = vmatpush2.msra.mxu0 0.0
        %1801 = vmatprep.subr.mxu0 0.0
        %1802 = vmatpush2.msra.mxu0 0.0
        %1803 = vmatprep.subr.mxu0 0.0
        %1804 = vmatpush2.msra.mxu0 0.0
        %1805 = vmatprep.subr.mxu0 0.0
        %1806 = vmatpush2.msra.mxu0 0.0
        %1807 = vmatprep.subr.mxu0 0.0
        %1808 = vmatpush2.msra.mxu0 0.0
        %1809 = vmatprep.subr.mxu0 0.0
        %1810 = vmatpush2.msra.mxu0 0.0
        %1811 = vmatprep.subr.mxu0 0.0
        %1812 = vmatpush2.msra.mxu0 0.0
        %1813 = vmatprep.subr.mxu0 0.0
        %1814 = vmatpush2.msra.mxu0 0.0
        %1815 = vmatprep.subr.mxu0 0.0
        %1816 = vmatpush2.msra.mxu0 0.0
        %1817 = vmatprep.subr.mxu0 0.0
        %1818 = vmatpush2.msra.mxu0 0.0
        %1819 = vmatprep.mubr.f32.mxu0 0.0
        %v1820 = vand.u32 %v1611, 4294901760
        %1821 = vmatmul.mubr.f32.gmra.mxu0 %v1820
        %v1822 = vpop.f32.mrf.mxu0
        %v1823 = vadd.f32 %v1701, %v1822
        %v1824 = vpop.f32.mrf.mxu0
        %v1825 = vadd.f32 %v1703, %v1824
        %1826 = vdwg.mxu0
        %1827 = vmatprep.subr.mxu0 0.0
        %1828 = vmatpush1.msra.mxu0 0.0
        %1829 = vmatprep.subr.mxu0 0.0
        %1830 = vmatpush1.msra.mxu0 0.0
        %1831 = vmatprep.subr.mxu0 0.0
        %1832 = vmatpush1.msra.mxu0 0.0
        %1833 = vmatprep.subr.mxu0 0.0
        %1834 = vmatpush1.msra.mxu0 0.0
        %1835 = vmatprep.subr.mxu0 0.0
        %1836 = vmatpush1.msra.mxu0 0.0
        %1837 = vmatprep.subr.mxu0 0.0
        %1838 = vmatpush1.msra.mxu0 0.0
        %1839 = vmatprep.subr.mxu0 0.0
        %1840 = vmatpush1.msra.mxu0 0.0
        %1841 = vmatprep.subr.mxu0 0.0
        %1842 = vmatpush1.msra.mxu0 0.0
        %1843 = vmatprep.subr.mxu0 0.0
        %1844 = vmatpush1.msra.mxu0 0.0
        %1845 = vmatprep.subr.mxu0 0.0
        %1846 = vmatpush1.msra.mxu0 0.0
        %1847 = vmatprep.subr.mxu0 0.0
        %1848 = vmatpush1.msra.mxu0 0.0
        %v1849 = vand.u32 %v1617, 4294901760
        %v1850 = vsub.f32 %v1617, %v1849
        %1851 = vmatprep.subr.mxu0 %v1850
        %v1852 = vand.u32 %v1614, 4294901760
        %v1853 = vsub.f32 %v1614, %v1852
        %1854 = vmatpush1.msra.mxu0 %v1853
        %v1855 = vand.u32 %v1598, 4294901760
        %v1856 = vsub.f32 %v1598, %v1855
        %1857 = vmatprep.subr.mxu0 %v1856
        %v1858 = vand.u32 %v1597, 4294901760
        %v1859 = vsub.f32 %v1597, %v1858
        %1860 = vmatpush1.msra.mxu0 %v1859
        %v1861 = vand.u32 %v1596, 4294901760
        %v1862 = vsub.f32 %v1596, %v1861
        %1863 = vmatprep.subr.mxu0 %v1862
        %v1864 = vand.u32 %v1595, 4294901760
        %v1865 = vsub.f32 %v1595, %v1864
        %1866 = vmatpush1.msra.mxu0 %v1865
        %v1867 = vand.u32 %v1594, 4294901760
        %v1868 = vsub.f32 %v1594, %v1867
        %1869 = vmatprep.subr.mxu0 %v1868
        %v1870 = vand.u32 %v1593, 4294901760
        %v1871 = vsub.f32 %v1593, %v1870
        %1872 = vmatpush1.msra.mxu0 %v1871
        %v1873 = vand.u32 %v1592, 4294901760
        %v1874 = vsub.f32 %v1592, %v1873
        %1875 = vmatprep.subr.mxu0 %v1874
        %v1876 = vand.u32 %v1591, 4294901760
        %v1877 = vsub.f32 %v1591, %v1876
        %1878 = vmatpush1.msra.mxu0 %v1877
        %1879 = vmatprep.subr.mxu0 0.0
        %1880 = vmatpush2.msra.mxu0 0.0
        %1881 = vmatprep.subr.mxu0 0.0
        %1882 = vmatpush2.msra.mxu0 0.0
        %1883 = vmatprep.subr.mxu0 0.0
        %1884 = vmatpush2.msra.mxu0 0.0
        %1885 = vmatprep.subr.mxu0 0.0
        %1886 = vmatpush2.msra.mxu0 0.0
        %1887 = vmatprep.subr.mxu0 0.0
        %1888 = vmatpush2.msra.mxu0 0.0
        %1889 = vmatprep.subr.mxu0 0.0
        %1890 = vmatpush2.msra.mxu0 0.0
        %1891 = vmatprep.subr.mxu0 0.0
        %1892 = vmatpush2.msra.mxu0 0.0
        %1893 = vmatprep.subr.mxu0 0.0
        %1894 = vmatpush2.msra.mxu0 0.0
        %1895 = vmatprep.subr.mxu0 0.0
        %1896 = vmatpush2.msra.mxu0 0.0
        %1897 = vmatprep.subr.mxu0 0.0
        %1898 = vmatpush2.msra.mxu0 0.0
        %1899 = vmatprep.subr.mxu0 0.0
        %1900 = vmatpush2.msra.mxu0 0.0
        %1901 = vmatprep.subr.mxu0 0.0
        %1902 = vmatpush2.msra.mxu0 0.0
        %1903 = vmatprep.subr.mxu0 0.0
        %1904 = vmatpush2.msra.mxu0 0.0
        %1905 = vmatprep.subr.mxu0 0.0
        %1906 = vmatpush2.msra.mxu0 0.0
        %1907 = vmatprep.subr.mxu0 0.0
        %1908 = vmatpush2.msra.mxu0 0.0
        %1909 = vmatprep.subr.mxu0 0.0
        %1910 = vmatpush2.msra.mxu0 0.0
        %1911 = vmatprep.mubr.f32.mxu0 0.0
        %v1912 = vand.u32 %v1611, 4294901760
        %v1913 = vsub.f32 %v1611, %v1912
        %1914 = vmatmul.mubr.f32.gmra.mxu0 %v1913
        %v1915 = vpop.f32.mrf.mxu0
        %v1916 = vadd.f32 %v1823, %v1915
        %v1917 = vpop.f32.mrf.mxu0
        %v1918 = vadd.f32 %v1825, %v1917
        %1919 = vdwg.mxu0
        %1920 = vmatprep.subr.mxu0 0.0
        %1921 = vmatpush1.msra.mxu0 0.0
        %1922 = vmatprep.subr.mxu0 0.0
        %1923 = vmatpush1.msra.mxu0 0.0
        %1924 = vmatprep.subr.mxu0 0.0
        %1925 = vmatpush1.msra.mxu0 0.0
        %1926 = vmatprep.subr.mxu0 0.0
        %1927 = vmatpush1.msra.mxu0 0.0
        %1928 = vmatprep.subr.mxu0 0.0
        %1929 = vmatpush1.msra.mxu0 0.0
        %1930 = vmatprep.subr.mxu0 0.0
        %1931 = vmatpush1.msra.mxu0 0.0
        %1932 = vmatprep.subr.mxu0 0.0
        %1933 = vmatpush1.msra.mxu0 0.0
        %1934 = vmatprep.subr.mxu0 0.0
        %1935 = vmatpush1.msra.mxu0 0.0
        %1936 = vmatprep.subr.mxu0 0.0
        %1937 = vmatpush1.msra.mxu0 0.0
        %1938 = vmatprep.subr.mxu0 0.0
        %1939 = vmatpush1.msra.mxu0 0.0
        %1940 = vmatprep.subr.mxu0 0.0
        %1941 = vmatpush1.msra.mxu0 0.0
        %v1942 = vand.u32 %v1617, 4294901760
        %1943 = vmatprep.subr.mxu0 %v1942
        %v1944 = vand.u32 %v1614, 4294901760
        %1945 = vmatpush1.msra.mxu0 %v1944
        %v1946 = vand.u32 %v1598, 4294901760
        %1947 = vmatprep.subr.mxu0 %v1946
        %v1948 = vand.u32 %v1597, 4294901760
        %1949 = vmatpush1.msra.mxu0 %v1948
        %v1950 = vand.u32 %v1596, 4294901760
        %1951 = vmatprep.subr.mxu0 %v1950
        %v1952 = vand.u32 %v1595, 4294901760
        %1953 = vmatpush1.msra.mxu0 %v1952
        %v1954 = vand.u32 %v1594, 4294901760
        %1955 = vmatprep.subr.mxu0 %v1954
        %v1956 = vand.u32 %v1593, 4294901760
        %1957 = vmatpush1.msra.mxu0 %v1956
        %v1958 = vand.u32 %v1592, 4294901760
        %1959 = vmatprep.subr.mxu0 %v1958
        %v1960 = vand.u32 %v1591, 4294901760
        %1961 = vmatpush1.msra.mxu0 %v1960
        %1962 = vmatprep.subr.mxu0 0.0
        %1963 = vmatpush2.msra.mxu0 0.0
        %1964 = vmatprep.subr.mxu0 0.0
        %1965 = vmatpush2.msra.mxu0 0.0
        %1966 = vmatprep.subr.mxu0 0.0
        %1967 = vmatpush2.msra.mxu0 0.0
        %1968 = vmatprep.subr.mxu0 0.0
        %1969 = vmatpush2.msra.mxu0 0.0
        %1970 = vmatprep.subr.mxu0 0.0
        %1971 = vmatpush2.msra.mxu0 0.0
        %1972 = vmatprep.subr.mxu0 0.0
        %1973 = vmatpush2.msra.mxu0 0.0
        %1974 = vmatprep.subr.mxu0 0.0
        %1975 = vmatpush2.msra.mxu0 0.0
        %1976 = vmatprep.subr.mxu0 0.0
        %1977 = vmatpush2.msra.mxu0 0.0
        %1978 = vmatprep.subr.mxu0 0.0
        %1979 = vmatpush2.msra.mxu0 0.0
        %1980 = vmatprep.subr.mxu0 0.0
        %1981 = vmatpush2.msra.mxu0 0.0
        %1982 = vmatprep.subr.mxu0 0.0
        %1983 = vmatpush2.msra.mxu0 0.0
        %1984 = vmatprep.subr.mxu0 0.0
        %1985 = vmatpush2.msra.mxu0 0.0
        %1986 = vmatprep.subr.mxu0 0.0
        %1987 = vmatpush2.msra.mxu0 0.0
        %1988 = vmatprep.subr.mxu0 0.0
        %1989 = vmatpush2.msra.mxu0 0.0
        %1990 = vmatprep.subr.mxu0 0.0
        %1991 = vmatpush2.msra.mxu0 0.0
        %1992 = vmatprep.subr.mxu0 0.0
        %1993 = vmatpush2.msra.mxu0 0.0
        %1994 = vmatprep.mubr.f32.mxu0 0.0
        %v1995 = vand.u32 %v1611, 4294901760
        %v1996 = vsub.f32 %v1611, %v1995
        %v1997 = vand.u32 %v1996, 4294901760
        %1998 = vmatmul.mubr.f32.gmra.mxu0 %v1997
        %v1999 = vpop.f32.mrf.mxu0
        %v2000 = vadd.f32 %v1916, %v1999
        %v2001 = vpop.f32.mrf.mxu0
        %v2002 = vadd.f32 %v1918, %v2001
        %2003 = vdwg.mxu0
        %2004 = vmatprep.subr.mxu0 0.0
        %2005 = vmatpush1.msra.mxu0 0.0
        %2006 = vmatprep.subr.mxu0 0.0
        %2007 = vmatpush1.msra.mxu0 0.0
        %2008 = vmatprep.subr.mxu0 0.0
        %2009 = vmatpush1.msra.mxu0 0.0
        %2010 = vmatprep.subr.mxu0 0.0
        %2011 = vmatpush1.msra.mxu0 0.0
        %2012 = vmatprep.subr.mxu0 0.0
        %2013 = vmatpush1.msra.mxu0 0.0
        %2014 = vmatprep.subr.mxu0 0.0
        %2015 = vmatpush1.msra.mxu0 0.0
        %2016 = vmatprep.subr.mxu0 0.0
        %2017 = vmatpush1.msra.mxu0 0.0
        %2018 = vmatprep.subr.mxu0 0.0
        %2019 = vmatpush1.msra.mxu0 0.0
        %2020 = vmatprep.subr.mxu0 0.0
        %2021 = vmatpush1.msra.mxu0 0.0
        %2022 = vmatprep.subr.mxu0 0.0
        %2023 = vmatpush1.msra.mxu0 0.0
        %2024 = vmatprep.subr.mxu0 0.0
        %2025 = vmatpush1.msra.mxu0 0.0
        %v2026 = vand.u32 %v1617, 4294901760
        %v2027 = vsub.f32 %v1617, %v2026
        %v2028 = vand.u32 %v2027, 4294901760
        %2029 = vmatprep.subr.mxu0 %v2028
        %v2030 = vand.u32 %v1614, 4294901760
        %v2031 = vsub.f32 %v1614, %v2030
        %v2032 = vand.u32 %v2031, 4294901760
        %2033 = vmatpush1.msra.mxu0 %v2032
        %v2034 = vand.u32 %v1598, 4294901760
        %v2035 = vsub.f32 %v1598, %v2034
        %v2036 = vand.u32 %v2035, 4294901760
        %2037 = vmatprep.subr.mxu0 %v2036
        %v2038 = vand.u32 %v1597, 4294901760
        %v2039 = vsub.f32 %v1597, %v2038
        %v2040 = vand.u32 %v2039, 4294901760
        %2041 = vmatpush1.msra.mxu0 %v2040
        %v2042 = vand.u32 %v1596, 4294901760
        %v2043 = vsub.f32 %v1596, %v2042
        %v2044 = vand.u32 %v2043, 4294901760
        %2045 = vmatprep.subr.mxu0 %v2044
        %v2046 = vand.u32 %v1595, 4294901760
        %v2047 = vsub.f32 %v1595, %v2046
        %v2048 = vand.u32 %v2047, 4294901760
        %2049 = vmatpush1.msra.mxu0 %v2048
        %v2050 = vand.u32 %v1594, 4294901760
        %v2051 = vsub.f32 %v1594, %v2050
        %v2052 = vand.u32 %v2051, 4294901760
        %2053 = vmatprep.subr.mxu0 %v2052
        %v2054 = vand.u32 %v1593, 4294901760
        %v2055 = vsub.f32 %v1593, %v2054
        %v2056 = vand.u32 %v2055, 4294901760
        %2057 = vmatpush1.msra.mxu0 %v2056
        %v2058 = vand.u32 %v1592, 4294901760
        %v2059 = vsub.f32 %v1592, %v2058
        %v2060 = vand.u32 %v2059, 4294901760
        %2061 = vmatprep.subr.mxu0 %v2060
        %v2062 = vand.u32 %v1591, 4294901760
        %v2063 = vsub.f32 %v1591, %v2062
        %v2064 = vand.u32 %v2063, 4294901760
        %2065 = vmatpush1.msra.mxu0 %v2064
        %2066 = vmatprep.subr.mxu0 0.0
        %2067 = vmatpush2.msra.mxu0 0.0
        %2068 = vmatprep.subr.mxu0 0.0
        %2069 = vmatpush2.msra.mxu0 0.0
        %2070 = vmatprep.subr.mxu0 0.0
        %2071 = vmatpush2.msra.mxu0 0.0
        %2072 = vmatprep.subr.mxu0 0.0
        %2073 = vmatpush2.msra.mxu0 0.0
        %2074 = vmatprep.subr.mxu0 0.0
        %2075 = vmatpush2.msra.mxu0 0.0
        %2076 = vmatprep.subr.mxu0 0.0
        %2077 = vmatpush2.msra.mxu0 0.0
        %2078 = vmatprep.subr.mxu0 0.0
        %2079 = vmatpush2.msra.mxu0 0.0
        %2080 = vmatprep.subr.mxu0 0.0
        %2081 = vmatpush2.msra.mxu0 0.0
        %2082 = vmatprep.subr.mxu0 0.0
        %2083 = vmatpush2.msra.mxu0 0.0
        %2084 = vmatprep.subr.mxu0 0.0
        %2085 = vmatpush2.msra.mxu0 0.0
        %2086 = vmatprep.subr.mxu0 0.0
        %2087 = vmatpush2.msra.mxu0 0.0
        %2088 = vmatprep.subr.mxu0 0.0
        %2089 = vmatpush2.msra.mxu0 0.0
        %2090 = vmatprep.subr.mxu0 0.0
        %2091 = vmatpush2.msra.mxu0 0.0
        %2092 = vmatprep.subr.mxu0 0.0
        %2093 = vmatpush2.msra.mxu0 0.0
        %2094 = vmatprep.subr.mxu0 0.0
        %2095 = vmatpush2.msra.mxu0 0.0
        %2096 = vmatprep.subr.mxu0 0.0
        %2097 = vmatpush2.msra.mxu0 0.0
        %2098 = vmatprep.mubr.f32.mxu0 0.0
        %v2099 = vand.u32 %v1611, 4294901760
        %2100 = vmatmul.mubr.f32.gmra.mxu0 %v2099
        %v2101 = vpop.f32.mrf.mxu0
        %v2102 = vadd.f32 %v2000, %v2101
        %v2103 = vpop.f32.mrf.mxu0
        %v2104 = vadd.f32 %v2002, %v2103
        %2105 = vdwg.mxu0
        %2106 = vmatprep.subr.mxu0 0.0
        %2107 = vmatpush1.msra.mxu0 0.0
        %2108 = vmatprep.subr.mxu0 0.0
        %2109 = vmatpush1.msra.mxu0 0.0
        %2110 = vmatprep.subr.mxu0 0.0
        %2111 = vmatpush1.msra.mxu0 0.0
        %2112 = vmatprep.subr.mxu0 0.0
        %2113 = vmatpush1.msra.mxu0 0.0
        %2114 = vmatprep.subr.mxu0 0.0
        %2115 = vmatpush1.msra.mxu0 0.0
        %2116 = vmatprep.subr.mxu0 0.0
        %2117 = vmatpush1.msra.mxu0 0.0
        %2118 = vmatprep.subr.mxu0 0.0
        %2119 = vmatpush1.msra.mxu0 0.0
        %2120 = vmatprep.subr.mxu0 0.0
        %2121 = vmatpush1.msra.mxu0 0.0
        %2122 = vmatprep.subr.mxu0 0.0
        %2123 = vmatpush1.msra.mxu0 0.0
        %2124 = vmatprep.subr.mxu0 0.0
        %2125 = vmatpush1.msra.mxu0 0.0
        %2126 = vmatprep.subr.mxu0 0.0
        %2127 = vmatpush1.msra.mxu0 0.0
        %v2128 = vand.u32 %v1617, 4294901760
        %2129 = vmatprep.subr.mxu0 %v2128
        %v2130 = vand.u32 %v1614, 4294901760
        %2131 = vmatpush1.msra.mxu0 %v2130
        %v2132 = vand.u32 %v1598, 4294901760
        %2133 = vmatprep.subr.mxu0 %v2132
        %v2134 = vand.u32 %v1597, 4294901760
        %2135 = vmatpush1.msra.mxu0 %v2134
        %v2136 = vand.u32 %v1596, 4294901760
        %2137 = vmatprep.subr.mxu0 %v2136
        %v2138 = vand.u32 %v1595, 4294901760
        %2139 = vmatpush1.msra.mxu0 %v2138
        %v2140 = vand.u32 %v1594, 4294901760
        %2141 = vmatprep.subr.mxu0 %v2140
        %v2142 = vand.u32 %v1593, 4294901760
        %2143 = vmatpush1.msra.mxu0 %v2142
        %v2144 = vand.u32 %v1592, 4294901760
        %2145 = vmatprep.subr.mxu0 %v2144
        %v2146 = vand.u32 %v1591, 4294901760
        %2147 = vmatpush1.msra.mxu0 %v2146
        %2148 = vmatprep.subr.mxu0 0.0
        %2149 = vmatpush2.msra.mxu0 0.0
        %2150 = vmatprep.subr.mxu0 0.0
        %2151 = vmatpush2.msra.mxu0 0.0
        %2152 = vmatprep.subr.mxu0 0.0
        %2153 = vmatpush2.msra.mxu0 0.0
        %2154 = vmatprep.subr.mxu0 0.0
        %2155 = vmatpush2.msra.mxu0 0.0
        %2156 = vmatprep.subr.mxu0 0.0
        %2157 = vmatpush2.msra.mxu0 0.0
        %2158 = vmatprep.subr.mxu0 0.0
        %2159 = vmatpush2.msra.mxu0 0.0
        %2160 = vmatprep.subr.mxu0 0.0
        %2161 = vmatpush2.msra.mxu0 0.0
        %2162 = vmatprep.subr.mxu0 0.0
        %2163 = vmatpush2.msra.mxu0 0.0
        %2164 = vmatprep.subr.mxu0 0.0
        %2165 = vmatpush2.msra.mxu0 0.0
        %2166 = vmatprep.subr.mxu0 0.0
        %2167 = vmatpush2.msra.mxu0 0.0
        %2168 = vmatprep.subr.mxu0 0.0
        %2169 = vmatpush2.msra.mxu0 0.0
        %2170 = vmatprep.subr.mxu0 0.0
        %2171 = vmatpush2.msra.mxu0 0.0
        %2172 = vmatprep.subr.mxu0 0.0
        %2173 = vmatpush2.msra.mxu0 0.0
        %2174 = vmatprep.subr.mxu0 0.0
        %2175 = vmatpush2.msra.mxu0 0.0
        %2176 = vmatprep.subr.mxu0 0.0
        %2177 = vmatpush2.msra.mxu0 0.0
        %2178 = vmatprep.subr.mxu0 0.0
        %2179 = vmatpush2.msra.mxu0 0.0
        %2180 = vmatprep.mubr.f32.mxu0 0.0
        %v2181 = vand.u32 %v1611, 4294901760
        %2182 = vmatmul.mubr.f32.gmra.mxu0 %v2181
        %v2183 = vpop.f32.mrf.mxu0
        %v2184 = vadd.f32 %v2102, %v2183
        %v2185 = vpop.f32.mrf.mxu0
        %v2186 = vadd.f32 %v2104, %v2185
        %2187 = vdwg.mxu0
        %v2188 = vxor.u32 %v2184, 2147483648
        %v2189 = vxor.u32 %v2186, 2147483648
        %v2190 = vmul.f32 %v2188, 1.442695
        %v2191 = vpow.pop %v2190
        %v2192 = vmul.f32 %v2189, 1.442695
        %v2193 = vpow.pop %v2192
        %v2194 = vadd.f32 %v2191, 1.0
        %v2195 = vadd.f32 %v2193, 1.0
        %v2196 = vrcp.pop %v2194
        %v2197 = vmul.f32 1.0, %v2196
        %v2198 = vrcp.pop %v2195
        %v2199 = vmul.f32 1.0, %v2198
        %v2202 = vcombine.low %v2197, %v2199
        %v2204 = vunpack.c.l.s4 1966171168
        %v2205 = vunpack.c.0.s8 %v2204
        %v2206 = vlaneseq
        %v2207 = vshrl.u32 %v2206, 7
        %v2208 = vsub.s32 %v2205, %v2207
        %v2209 = vrot.slane %v2202, %v2208
        %v2211 = vunpack.c.l.s4 1966171168
        %v2212 = vunpack.c.0.s8 %v2211
        %v2213 = vlaneseq
        %v2214 = vshrl.u32 %v2213, 7
        %v2215 = vsub.s32 %v2212, %v2214
        %v2216 = vrot.slane %v2209, %v2215
        %v2218 = vlaneseq
        %vm2219 = vcmp.ge.s32.totalorder %v2218, 0
        %vm2220 = vcmp.lt.s32.totalorder %v2218, 256
        %vm2221 = vmand %vm2219, %vm2220
        %2222 = vst.msk [vmem:[%s334] sm:$0x3] %vm2221, %v2216
        %v2223 = vadd.f32 %v374, 1.0
        %v2224 = vlaneseq
        %v2225 = vshrl.u32 %v2224, 7
        %v2226 = vsub.s32 0, %v2225
        %v2227 = vrot.slane %v2197, %v2226
        %v2228 = vlaneseq
        %v2229 = vshrl.u32 %v2228, 7
        %v2230 = vsub.s32 0, %v2229
        %v2231 = vrot.slane %v2199, %v2230
        %v2232 = vadd.f32 %v2223, %v2227
        %v2233 = vadd.f32 %v2223, %v2231
        %v2234 = vmul.f32 %v335, %v2232
        %v2235 = vmul.f32 %v336, %v2233
        %2236 = vst [vmem:[%s327] sm:$0xff] %v2234
        %2237 = vst [vmem:[%s327 + $0x8] sm:$0xff] %v2235
        %s2238 = sand.u32 %s191, 1
        %s2239 = scalar_lea.sflag [#allocation5], %s2238
        %s2240 = sand.u32 %s191, 1
        %s2241 = smul.addr %s2240, 16
        %s2242 = scalar_lea.vmem [#allocation6], %s2241
        %s2243 = sand.u32 %s217, 1
        %s2244 = scalar_lea.sflag [#allocation8], %s2243
        %s2245 = sand.u32 %s217, 1
        %s2246 = smul.addr %s2245, 2
        %s2247 = scalar_lea.vmem [#allocation7], %s2246
        // Predicated region
        $region53: #{tpu_custom_call.1} parent=47 // pred_check
          %p2248 = pneg %p201
        $region54: #{tpu_custom_call.1} parent=47 // pred_check_branch
          %2250 = sbr.rel (%p2248) target = $region56
        $region55: #{tpu_custom_call.1} parent=47 // pred_region
          %s2252 = ssub.s32 256, 256
          %2253 = vsyncadd %s2239, %s2252
          %s2254 = smul.addr %s31, 2
          %s2255 = smul.addr %s2254, 128
          %s2256 = scalar_lea.hbm %s7, %s2255
          %s2258 = sshll.u32 %s2242, 4
          %s2259 = int_to_ptr.vmem [resolvable:$true] %s2258
          %2261 = dma.vmem_to_hbm [thread:$0]  %s2259, 256, %s2256, %s2239
        $region56: #{tpu_custom_call.1} parent=47 // pred_fallthru
          _
        // Predicated region
        $region57: #{tpu_custom_call.1} parent=47 // pred_check
          %p2262 = pneg %p227
        $region58: #{tpu_custom_call.1} parent=47 // pred_check_branch
          %2264 = sbr.rel (%p2262) target = $region60
        $region59: #{tpu_custom_call.1} parent=47 // pred_region
          %s2266 = ssub.s32 32, 32
          %2267 = vsyncadd %s2244, %s2266
          %s2268 = smul.addr %s31, 2
          %s2269 = smul.addr %s2268, 16
          %s2270 = scalar_lea.hbm %s8, %s2269
          %s2272 = sshll.u32 %s2247, 4
          %s2273 = int_to_ptr.vmem [resolvable:$true] %s2272
          %2275 = dma.vmem_to_hbm [thread:$0]  %s2273, 32, %s2270, %s2244
        $region60: #{tpu_custom_call.1} parent=47 // pred_fallthru
          _
      $region48: #{tpu_custom_call.1} parent=5 // pred_fallthru
        _
      %p2276 = scmp.le.s32.totalorder 2, %s26
      // Predicated region
      $region61: #{tpu_custom_call.1} parent=5 // pred_check
        %p2277 = pneg %p2276
      $region62: #{tpu_custom_call.1} parent=5 // pred_check_branch
        %2279 = sbr.rel (%p2277) target = $region64
      $region63: #{tpu_custom_call.1} parent=5 // pred_region
        %s2280 = ssub.s32 %s26, 2
        // Predicated region
        $region65: #{tpu_custom_call.1} parent=63 // pred_check
          %p2281 = pneg %p207
        $region66: #{tpu_custom_call.1} parent=63 // pred_check_branch
          %2283 = sbr.rel (%p2281) target = $region68
        $region67: #{tpu_custom_call.1} parent=63 // pred_region
          %s2284 = sand.u32 %s192, 1
          %s2285 = scalar_lea.sflag [#allocation5], %s2284
          %s2286 = sand.u32 %s192, 1
          %s2287 = smul.addr %s2286, 16
          %s2288 = scalar_lea.vmem [#allocation6], %s2287
          %2289 = dma.done %s2285, 256
        $region68: #{tpu_custom_call.1} parent=63 // pred_fallthru
          _
        // Predicated region
        $region69: #{tpu_custom_call.1} parent=63 // pred_check
          %p2290 = pneg %p233
        $region70: #{tpu_custom_call.1} parent=63 // pred_check_branch
          %2292 = sbr.rel (%p2290) target = $region72
        $region71: #{tpu_custom_call.1} parent=63 // pred_region
          %s2293 = sand.u32 %s218, 1
          %s2294 = scalar_lea.sflag [#allocation8], %s2293
          %s2295 = sand.u32 %s218, 1
          %s2296 = smul.addr %s2295, 2
          %s2297 = scalar_lea.vmem [#allocation7], %s2296
          %2298 = dma.done %s2294, 32
        $region72: #{tpu_custom_call.1} parent=63 // pred_fallthru
          _
      $region64: #{tpu_custom_call.1} parent=5 // pred_fallthru
        _
    $region6: #{tpu_custom_call.1} parent=1 // loop_footer
      %s30 = sadd.s32 1, %s26
    $region7: #{tpu_custom_call.1} parent=1 // loop_footer_branch
      %25 = sbr.rel target = $region3
    $region8: #{tpu_custom_call.1} parent=1 // loop_exit
      _
    %2299 = vsyncpa [#allocation4], 1
    %s2300 = scalar_lea.sflag [#allocation4], 1
    %2301 = vsyncpa %s2300, 1
    %2302 = vsyncpa [#allocation5], 1
    %s2303 = scalar_lea.sflag [#allocation5], 1
    %2304 = vsyncpa %s2303, 1
    %2305 = vsyncpa [#allocation8], 1
    %s2306 = scalar_lea.sflag [#allocation8], 1
    %2307 = vsyncpa %s2306, 1

</llo_original>
